<compile_context>
chip_gen: v7x
topology: tpu7x:2x2x1
jax: 0.10.0
libtpu: 0.0.40
codegen_flags: <defaults>
</compile_context>

<pallas_src>
import functools
import math

import jax
import jax.numpy as jnp
from jax.experimental import pallas as pl
from jax.experimental.pallas import tpu as pltpu


def _layernorm(x, gamma, beta, eps=1e-12):
    mu = jnp.mean(x, axis=-1, keepdims=True)
    var = jnp.mean(jnp.square(x - mu), axis=-1, keepdims=True)
    return (x - mu) * jax.lax.rsqrt(var + eps) * gamma + beta


def rel1_layer_kernel(n_heads,
                      qh_ref, kpr_ref, vh_ref, cbias_ref, x_ref,
                      wao_ref, bao_ref, ln1_g_ref, ln1_b_ref,
                      wi_ref, bi_ref, wo_ref, bo_ref, ln2_g_ref, ln2_b_ref,
                      out_ref):
    # ---- relative-position attention for this query tile (all heads batched) ----
    # scores_h = (q_h*scale) @ (k_h + r_emb_h)^T + [(k_h.r_w_bias_h + r_bias_h)*scale + mask]
    s = jnp.einsum('hid,hjd->hij', qh_ref[0], kpr_ref[0],
                   preferred_element_type=jnp.float32) + cbias_ref[0]   # (nH, tq, N) f32
    s = s - jnp.max(s, axis=-1, keepdims=True)
    p = jnp.exp(s)
    p = p * pl.reciprocal(jnp.sum(p, axis=-1, keepdims=True), approx=True)
    ctx_h = jnp.einsum('hij,hjd->hid', p.astype(jnp.bfloat16), vh_ref[0],
                       preferred_element_type=jnp.float32)              # (nH, tq, dH) f32
    ctx_b = ctx_h.astype(jnp.bfloat16)

    # BertSelfOutput: head-merge folded into the output projection as per-head MXU
    # matmuls accumulated in f32 (no lane-concat relayout), + residual + LayerNorm.
    acc = x_ref[0] + bao_ref[...]                                        # (tq, H) f32
    for h in range(n_heads):
        acc = acc + jnp.dot(ctx_b[h], wao_ref[h],
                            preferred_element_type=jnp.float32)
    attn_out = _layernorm(acc, ln1_g_ref[...], ln1_b_ref[...])

    # BertIntermediate: dense + GELU (tanh approx)
    inter = (jnp.dot(attn_out.astype(jnp.bfloat16), wi_ref[...],
                     preferred_element_type=jnp.float32) + bi_ref[...])
    inter = jax.nn.gelu(inter, approximate=True)

    # BertOutput: dense + residual + LayerNorm
    out = (jnp.dot(inter.astype(jnp.bfloat16), wo_ref[...],
                   preferred_element_type=jnp.float32) + bo_ref[...] + attn_out)
    out_ref[0] = _layernorm(out, ln2_g_ref[...], ln2_b_ref[...])


def _probe_copy_kernel(x_ref, o_ref):
    o_ref[...] = x_ref[...]


@functools.lru_cache(maxsize=None)
def _single_buffering_supported():
    """Probe whether BlockSpec(pipeline_mode=pl.Buffered(1)) compiles on this JAX/TPU."""
    try:
        spec = pl.BlockSpec((8, 128), lambda i: (0, 0), pipeline_mode=pl.Buffered(1))
        x = jnp.zeros((8, 128), jnp.float32)
        y = pl.pallas_call(
            _probe_copy_kernel,
            out_shape=jax.ShapeDtypeStruct((8, 128), jnp.float32),
            grid=(1,),
            in_specs=[spec],
            out_specs=pl.BlockSpec((8, 128), lambda i: (0, 0)),
        )(x)
        jax.block_until_ready(y)
        return True
    except Exception:
        return False


@functools.lru_cache(maxsize=None)
def _vmem_capacity_bytes():
    try:
        cap = getattr(pltpu.get_tpu_info(), "vmem_capacity_bytes", None)
        if cap:
            return int(cap)
    except Exception:
        pass
    return 64 * 1024 * 1024          # conservative default (v7x-sized VMEM)


def rel1_layer(params, hidden_states, attention_mask, n_heads, *, tq=None):
    """hidden_states: (B, N, H) f32; attention_mask: (B, N) with 1=keep, 0=mask."""
    B, N, H = hidden_states.shape
    d_head = H // n_heads
    I = params['wi'].shape[1]
    scale = 1.0 / math.sqrt(d_head)

    # Generation-aware tile size / VMEM budget: smaller q-tile and tighter cap on
    # 64-MiB-VMEM chips (v7x); bigger on 128-MiB chips (v5e/v6e).
    vmem_cap = _vmem_capacity_bytes()
    small_vmem = vmem_cap <= 64 * 1024 * 1024
    if tq is None:
        tq = 128 if small_vmem else 256
    tq = min(tq, N)
    assert N % tq == 0, "sequence length must be a multiple of the query tile"
    nq = N // tq
    vmem_limit = (vmem_cap // 16) * 13          # ~52 MiB (v7x) / ~104 MiB (v5e/v6e)

    x = hidden_states.astype(jnp.float32)
    ext_mask = ((1.0 - attention_mask) * -10000.0).astype(jnp.float32)       # (B, N)

    # ---- QKV projection + relative-position folding as a plain XLA prologue ----
    w_qkv = jnp.concatenate([params['wq'], params['wk'], params['wv']], axis=1)
    b_qkv = jnp.concatenate([params['bq'], params['bk'], params['bv']], axis=1)
    qkv = (x.reshape(B * N, H) @ w_qkv + b_qkv).reshape(B, N, 3 * H)          # f32

    def to_heads(a):                                        # (B, N, H) -> (B, nH, N, dH)
        return a.reshape(B, N, n_heads, d_head).transpose(0, 2, 1, 3)

    qh = to_heads(qkv[..., :H] * scale).astype(jnp.bfloat16)                 # pre-scaled q
    kh = to_heads(qkv[..., H:2 * H])                                         # f32
    vh = to_heads(qkv[..., 2 * H:]).astype(jnp.bfloat16)

    r_emb_h = params['r_emb'].transpose(1, 0, 2).astype(jnp.float32)         # (nH, N, dH)
    r_bias_h = params['r_bias'].T.astype(jnp.float32)                        # (nH, N)
    kpr = (kh + r_emb_h[None]).astype(jnp.bfloat16)                          # k + r_emb
    # column bias: (k . r_w_bias + r_bias)*scale + additive mask  -> (B, nH, 1, N)
    cbias = (jnp.einsum('bhjd,hd->bhj', kh, params['r_w_bias'].astype(jnp.float32))
             + r_bias_h[None]) * scale + ext_mask[:, None, :]
    cbias = cbias[:, :, None, :]

    wao_h = params['wao'].reshape(n_heads, d_head, H).astype(jnp.bfloat16)   # head-major
    wi = params['wi'].astype(jnp.bfloat16)
    wo = params['wo'].astype(jnp.bfloat16)

    # Constant-index weight/param blocks: single-buffer when supported (the second
    # pipeline buffer of a never-changing block is pure VMEM waste).
    single_buf = _single_buffering_supported()

    def const_spec(shape):
        n = len(shape)

        def idx(b, q):
            return (0,) * n

        if single_buf:
            return pl.BlockSpec(shape, idx, pipeline_mode=pl.Buffered(1))
        return pl.BlockSpec(shape, idx)

    in_specs = [
        pl.BlockSpec((1, n_heads, tq, d_head), lambda b, q: (b, 0, q, 0)),   # q heads (tile)
        pl.BlockSpec((1, n_heads, N, d_head), lambda b, q: (b, 0, 0, 0)),    # k + r_emb
        pl.BlockSpec((1, n_heads, N, d_head), lambda b, q: (b, 0, 0, 0)),    # v heads
        pl.BlockSpec((1, n_heads, 1, N), lambda b, q: (b, 0, 0, 0)),         # column bias
        pl.BlockSpec((1, tq, H), lambda b, q: (b, q, 0)),                    # residual x tile
        const_spec((n_heads, d_head, H)), const_spec((1, H)),                # attn-out dense
        const_spec((1, H)), const_spec((1, H)),                              # LayerNorm 1
        const_spec((H, I)), const_spec((1, I)),                              # intermediate
        const_spec((I, H)), const_spec((1, H)),                              # output dense
        const_spec((1, H)), const_spec((1, H)),                              # LayerNorm 2
    ]

    kernel = functools.partial(rel1_layer_kernel, n_heads)
    layer_output = pl.pallas_call(
        kernel,
        out_shape=jax.ShapeDtypeStruct((B, N, H), jnp.float32),
        grid=(B, nq),
        in_specs=in_specs,
        out_specs=pl.BlockSpec((1, tq, H), lambda b, q: (b, q, 0)),
        compiler_params=pltpu.CompilerParams(
            dimension_semantics=("parallel", "parallel"),
            vmem_limit_bytes=vmem_limit,
        ),
    )(qh, kpr, vh, cbias, x,
      wao_h, params['bao'], params['ln1_g'], params['ln1_b'],
      wi, params['bi'], wo, params['bo'],
      params['ln2_g'], params['ln2_b'])
    # Matches `outputs = (layer_output,) + outputs` with output_attentions=False.
    return (layer_output,)


def rel1_layer_reference(params, hidden_states, attention_mask, n_heads):
    """Pure-JAX f32 reference of the same forward pass."""
    B, N, H = hidden_states.shape
    d_head = H // n_heads
    x = hidden_states.astype(jnp.float32)
    mask = ((1.0 - attention_mask) * -10000.0)[:, None, None, :]             # (B,1,1,N)

    q = x @ params['wq'] + params['bq']
    k = x @ params['wk'] + params['bk']
    v = x @ params['wv'] + params['bv']

    def split(a):                                                            # -> (B,nH,N,dH)
        return a.reshape(B, N, n_heads, d_head).transpose(0, 2, 1, 3)

    qh, kh, vh = split(q), split(k), split(v)
    r_emb = params['r_emb'].transpose(1, 0, 2)                               # (nH, N, dH)
    r_bias = params['r_bias'].transpose(1, 0)                                # (nH, N)
    r_w_bias = params['r_w_bias']                                            # (nH, dH)

    ac = jnp.einsum('bhid,bhjd->bhij', qh + r_w_bias[None, :, None, :], kh)
    bd = jnp.einsum('bhid,hjd->bhij', qh, r_emb) + r_bias[None, :, None, :]
    scores = (ac + bd) / math.sqrt(d_head) + mask
    p = jax.nn.softmax(scores, axis=-1)
    ctx = jnp.einsum('bhij,bhjd->bhid', p, vh).transpose(0, 2, 1, 3).reshape(B, N, H)

    def ln(y, g, b_):
        mu = y.mean(-1, keepdims=True)
        var = ((y - mu) ** 2).mean(-1, keepdims=True)
        return (y - mu) * jax.lax.rsqrt(var + 1e-12) * g + b_

    attn_out = ln(ctx @ params['wao'] + params['bao'] + x,
                  params['ln1_g'], params['ln1_b'])
    inter = jax.nn.gelu(attn_out @ params['wi'] + params['bi'], approximate=True)
    return ln(inter @ params['wo'] + params['bo'] + attn_out,
              params['ln2_g'], params['ln2_b'])


def init_params(key, H, I, n_heads, N):
    d_head = H // n_heads
    ks = jax.random.split(key, 10)
    std = 0.02
    nrm = lambda k, s: (std * jax.random.normal(k, s, jnp.float32))
    return {
        'wq': nrm(ks[0], (H, H)), 'bq': jnp.zeros((1, H), jnp.float32),
        'wk': nrm(ks[1], (H, H)), 'bk': jnp.zeros((1, H), jnp.float32),
        'wv': nrm(ks[2], (H, H)), 'bv': jnp.zeros((1, H), jnp.float32),
        'r_emb': nrm(ks[3], (N, n_heads, d_head)),
        'r_w_bias': nrm(ks[4], (n_heads, d_head)),
        'r_bias': nrm(ks[5], (N, n_heads)),
        'wao': nrm(ks[6], (H, H)), 'bao': jnp.zeros((1, H), jnp.float32),
        'ln1_g': jnp.ones((1, H), jnp.float32), 'ln1_b': jnp.zeros((1, H), jnp.float32),
        'wi': nrm(ks[7], (H, I)), 'bi': jnp.zeros((1, I), jnp.float32),
        'wo': nrm(ks[8], (I, H)), 'bo': jnp.zeros((1, H), jnp.float32),
        'ln2_g': jnp.ones((1, H), jnp.float32), 'ln2_b': jnp.zeros((1, H), jnp.float32),
    }


if __name__ == "__main__":
    B, N, H, n_heads, I = 2, 8, 32, 4, 64

    key = jax.random.PRNGKey(0)
    k_x, k_p = jax.random.split(key)
    hidden_states = jax.random.normal(k_x, (B, N, H), jnp.float32)
    attention_mask = jnp.ones((B, N), jnp.float32)
    params = init_params(k_p, H, I, n_heads, N)

    outputs = rel1_layer(params, hidden_states, attention_mask, n_heads)
    layer_output = jax.block_until_ready(outputs[0])
    assert layer_output.shape == (B, N, H)

    ref = rel1_layer_reference(params, hidden_states, attention_mask, n_heads)
    err = float(jnp.max(jnp.abs(layer_output - ref)))
    assert math.isfinite(err) and err < 5e-2, f"max abs err {err}"
    print("KERNEL_OK")
</pallas_src>

<mosaic_0001>
module attributes {stable_mosaic.version = 11 : i64} {
  func.func @_probe_copy_kernel(%arg0: i32, %arg1: memref<8x128xf32, #tpu.memory_space<vmem>>, %arg2: memref<8x128xf32, #tpu.memory_space<vmem>>) attributes {dimension_semantics = [#tpu.dimension_semantics<arbitrary>], iteration_bounds = array<i64: 1>, scalar_prefetch = 0 : i64, scratch_operands = 0 : i64, tpu.core_type = #tpu.core_type<tc>, window_params = [{pipeline_mode = #tpu.pipeline_mode<synchronous>, transform_indices = @transform_0, window_bounds = array<i64: 8, 128>}, {pipeline_mode = #tpu.pipeline_mode<synchronous>, transform_indices = @transform_1, window_bounds = array<i64: 8, 128>}]} {
    %c0 = arith.constant 0 : index
    %c0_0 = arith.constant 0 : index
    %0 = vector.load %arg1[%c0, %c0_0] : memref<8x128xf32, #tpu.memory_space<vmem>>, vector<8x128xf32>
    %c0_1 = arith.constant 0 : index
    %c0_2 = arith.constant 0 : index
    %1 = vector.load %arg2[%c0_1, %c0_2] : memref<8x128xf32, #tpu.memory_space<vmem>>, vector<8x128xf32>
    tpu.vector_store %arg2[%c0_1, %c0_2], %0 {strides = array<i32>} : memref<8x128xf32, #tpu.memory_space<vmem>>, vector<8x128xf32>,
    return
  }
  func.func @transform_0(%arg0: i32) -> (i32, i32) {
    %c0_i32 = arith.constant 0 : i32
    %c0_i32_0 = arith.constant 0 : i32
    %c0_i32_1 = arith.constant 0 : i32
    return %c0_i32, %c0_i32_0 : i32, i32
  }
  func.func @transform_1(%arg0: i32) -> (i32, i32) {
    %c0_i32 = arith.constant 0 : i32
    %c0_i32_0 = arith.constant 0 : i32
    %c0_i32_1 = arith.constant 0 : i32
    return %c0_i32, %c0_i32_0 : i32, i32
  }
}

module attributes {stable_mosaic.version = 11 : i64} {
  func.func @rel1_layer_kernel(%arg0: i32, %arg1: i32, %arg2: memref<1x4x8x8xbf16, #tpu.memory_space<vmem>>, %arg3: memref<1x4x8x8xbf16, #tpu.memory_space<vmem>>, %arg4: memref<1x4x8x8xbf16, #tpu.memory_space<vmem>>, %arg5: memref<1x4x1x8xf32, #tpu.memory_space<vmem>>, %arg6: memref<1x8x32xf32, #tpu.memory_space<vmem>>, %arg7: memref<4x8x32xbf16, #tpu.memory_space<vmem>>, %arg8: memref<1x32xf32, #tpu.memory_space<vmem>>, %arg9: memref<1x32xf32, #tpu.memory_space<vmem>>, %arg10: memref<1x32xf32, #tpu.memory_space<vmem>>, %arg11: memref<32x64xbf16, #tpu.memory_space<vmem>>, %arg12: memref<1x64xf32, #tpu.memory_space<vmem>>, %arg13: memref<64x32xbf16, #tpu.memory_space<vmem>>, %arg14: memref<1x32xf32, #tpu.memory_space<vmem>>, %arg15: memref<1x32xf32, #tpu.memory_space<vmem>>, %arg16: memref<1x32xf32, #tpu.memory_space<vmem>>, %arg17: memref<1x8x32xf32, #tpu.memory_space<vmem>>) attributes {dimension_semantics = [#tpu.dimension_semantics<parallel>, #tpu.dimension_semantics<parallel>], iteration_bounds = array<i64: 2, 1>, scalar_prefetch = 0 : i64, scratch_operands = 0 : i64, tpu.core_type = #tpu.core_type<tc>, window_params = [{transform_indices = @transform_0, window_bounds = array<i64: 1, 4, 8, 8>}, {transform_indices = @transform_1, window_bounds = array<i64: 1, 4, 8, 8>}, {transform_indices = @transform_2, window_bounds = array<i64: 1, 4, 8, 8>}, {transform_indices = @transform_3, window_bounds = array<i64: 1, 4, 1, 8>}, {transform_indices = @transform_4, window_bounds = array<i64: 1, 8, 32>}, {pipeline_mode = #tpu.pipeline_mode<synchronous>, transform_indices = @transform_5, window_bounds = array<i64: 4, 8, 32>}, {pipeline_mode = #tpu.pipeline_mode<synchronous>, transform_indices = @transform_6, window_bounds = array<i64: 1, 32>}, {pipeline_mode = #tpu.pipeline_mode<synchronous>, transform_indices = @transform_7, window_bounds = array<i64: 1, 32>}, {pipeline_mode = #tpu.pipeline_mode<synchronous>, transform_indices = @transform_8, window_bounds = array<i64: 1, 32>}, {pipeline_mode = #tpu.pipeline_mode<synchronous>, transform_indices = @transform_9, window_bounds = array<i64: 32, 64>}, {pipeline_mode = #tpu.pipeline_mode<synchronous>, transform_indices = @transform_10, window_bounds = array<i64: 1, 64>}, {pipeline_mode = #tpu.pipeline_mode<synchronous>, transform_indices = @transform_11, window_bounds = array<i64: 64, 32>}, {pipeline_mode = #tpu.pipeline_mode<synchronous>, transform_indices = @transform_12, window_bounds = array<i64: 1, 32>}, {pipeline_mode = #tpu.pipeline_mode<synchronous>, transform_indices = @transform_13, window_bounds = array<i64: 1, 32>}, {pipeline_mode = #tpu.pipeline_mode<synchronous>, transform_indices = @transform_14, window_bounds = array<i64: 1, 32>}, {transform_indices = @transform_15, window_bounds = array<i64: 1, 8, 32>}]} {
    %c0 = arith.constant 0 : index
    %c0_0 = arith.constant 0 : index
    %c0_1 = arith.constant 0 : index
    %c0_2 = arith.constant 0 : index
    %0 = vector.load %arg2[%c0, %c0_0, %c0_1, %c0_2] : memref<1x4x8x8xbf16, #tpu.memory_space<vmem>>, vector<1x4x8x8xbf16>
    %1 = vector.shape_cast %0 : vector<1x4x8x8xbf16> to vector<4x8x8xbf16>
    %c0_3 = arith.constant 0 : index
    %c0_4 = arith.constant 0 : index
    %c0_5 = arith.constant 0 : index
    %c0_6 = arith.constant 0 : index
    %2 = vector.load %arg3[%c0_3, %c0_4, %c0_5, %c0_6] : memref<1x4x8x8xbf16, #tpu.memory_space<vmem>>, vector<1x4x8x8xbf16>
    %3 = vector.shape_cast %2 : vector<1x4x8x8xbf16> to vector<4x8x8xbf16>
    "tpu.trace_start"() <{level = 10 : i32, message = "hid,hjd->hij"}> : () -> ()
    %cst = arith.constant dense<0.000000e+00> : vector<4x8x8xf32>
    %4 = tpu.matmul %1, %3, %cst {dimension_numbers = #tpu.dot_dimension_numbers<[2], [2], [1], [1], [0, 0, 0, 1, 1, 1], [0], [0]>} : vector<4x8x8xbf16>, vector<4x8x8xbf16>, vector<4x8x8xf32> -> vector<4x8x8xf32>
    "tpu.trace_stop"() : () -> ()
    %c0_7 = arith.constant 0 : index
    %c0_8 = arith.constant 0 : index
    %c0_9 = arith.constant 0 : index
    %c0_10 = arith.constant 0 : index
    %5 = vector.load %arg5[%c0_7, %c0_8, %c0_9, %c0_10] : memref<1x4x1x8xf32, #tpu.memory_space<vmem>>, vector<1x4x1x8xf32>
    %6 = vector.shape_cast %5 : vector<1x4x1x8xf32> to vector<4x1x8xf32>
    %7 = vector.broadcast %6 : vector<4x1x8xf32> to vector<4x8x8xf32>
    %8 = arith.addf %4, %7 : vector<4x8x8xf32>
    %cst_11 = arith.constant dense<0xFF800000> : vector<4x8xf32>
    %9 = vector.multi_reduction <maximumf>, %8, %cst_11 [2] : vector<4x8x8xf32> to vector<4x8xf32>
    %10 = vector.shape_cast %9 : vector<4x8xf32> to vector<4x8x1xf32>
    %11 = vector.broadcast %10 : vector<4x8x1xf32> to vector<4x8x8xf32>
    %12 = arith.subf %8, %11 : vector<4x8x8xf32>
    %13 = math.exp %12 : vector<4x8x8xf32>
    %cst_12 = arith.constant dense<0.000000e+00> : vector<4x8xf32>
    %14 = vector.multi_reduction <add>, %13, %cst_12 [2] : vector<4x8x8xf32> to vector<4x8xf32>
    %15 = vector.shape_cast %14 : vector<4x8xf32> to vector<4x8x1xf32>
    %16 = tpu.reciprocal %15 {approx = true} : vector<4x8x1xf32> -> vector<4x8x1xf32>
    %17 = vector.broadcast %16 : vector<4x8x1xf32> to vector<4x8x8xf32>
    %18 = arith.mulf %13, %17 : vector<4x8x8xf32>
    %19 = arith.truncf %18 : vector<4x8x8xf32> to vector<4x8x8xbf16>
    %c0_13 = arith.constant 0 : index
    %c0_14 = arith.constant 0 : index
    %c0_15 = arith.constant 0 : index
    %c0_16 = arith.constant 0 : index
    %20 = vector.load %arg4[%c0_13, %c0_14, %c0_15, %c0_16] : memref<1x4x8x8xbf16, #tpu.memory_space<vmem>>, vector<1x4x8x8xbf16>
    %21 = vector.shape_cast %20 : vector<1x4x8x8xbf16> to vector<4x8x8xbf16>
    "tpu.trace_start"() <{level = 10 : i32, message = "hij,hjd->hid"}> : () -> ()
    %cst_17 = arith.constant dense<0.000000e+00> : vector<4x8x8xf32>
    %22 = tpu.matmul %19, %21, %cst_17 {dimension_numbers = #tpu.dot_dimension_numbers<[2], [1], [1], [2], [0, 0, 0, 1, 1, 2], [0], [0]>} : vector<4x8x8xbf16>, vector<4x8x8xbf16>, vector<4x8x8xf32> -> vector<4x8x8xf32>
    "tpu.trace_stop"() : () -> ()
    %23 = arith.truncf %22 : vector<4x8x8xf32> to vector<4x8x8xbf16>
    %c0_18 = arith.constant 0 : index
    %c0_19 = arith.constant 0 : index
    %c0_20 = arith.constant 0 : index
    %24 = vector.load %arg6[%c0_18, %c0_19, %c0_20] : memref<1x8x32xf32, #tpu.memory_space<vmem>>, vector<1x8x32xf32>
    %25 = vector.shape_cast %24 : vector<1x8x32xf32> to vector<8x32xf32>
    %c0_21 = arith.constant 0 : index
    %c0_22 = arith.constant 0 : index
    %26 = vector.load %arg8[%c0_21, %c0_22] : memref<1x32xf32, #tpu.memory_space<vmem>>, vector<1x32xf32>
    %27 = vector.broadcast %26 : vector<1x32xf32> to vector<8x32xf32>
    %28 = arith.addf %25, %27 : vector<8x32xf32>
    %29 = vector.extract_strided_slice %23 {offsets = [0, 0, 0], sizes = [1, 8, 8], strides = [1, 1, 1]} : vector<4x8x8xbf16> to vector<1x8x8xbf16>
    %30 = vector.shape_cast %29 : vector<1x8x8xbf16> to vector<8x8xbf16>
    %c0_23 = arith.constant 0 : index
    %c0_24 = arith.constant 0 : index
    %c0_25 = arith.constant 0 : index
    %31 = vector.load %arg7[%c0_23, %c0_24, %c0_25] : memref<4x8x32xbf16, #tpu.memory_space<vmem>>, vector<1x8x32xbf16>
    %32 = vector.shape_cast %31 : vector<1x8x32xbf16> to vector<8x32xbf16>
    %cst_26 = arith.constant dense<0.000000e+00> : vector<8x32xf32>
    %33 = tpu.matmul %30, %32, %cst_26 {dimension_numbers = #tpu.dot_dimension_numbers<[1], [0], [0], [1], [0, 0, 1, 1], [], []>} : vector<8x8xbf16>, vector<8x32xbf16>, vector<8x32xf32> -> vector<8x32xf32>
    %34 = arith.addf %28, %33 : vector<8x32xf32>
    %35 = vector.extract_strided_slice %23 {offsets = [1, 0, 0], sizes = [1, 8, 8], strides = [1, 1, 1]} : vector<4x8x8xbf16> to vector<1x8x8xbf16>
    %36 = vector.shape_cast %35 : vector<1x8x8xbf16> to vector<8x8xbf16>
    %c1 = arith.constant 1 : index
    %c0_27 = arith.constant 0 : index
    %c0_28 = arith.constant 0 : index
    %37 = vector.load %arg7[%c1, %c0_27, %c0_28] : memref<4x8x32xbf16, #tpu.memory_space<vmem>>, vector<1x8x32xbf16>
    %38 = vector.shape_cast %37 : vector<1x8x32xbf16> to vector<8x32xbf16>
    %cst_29 = arith.constant dense<0.000000e+00> : vector<8x32xf32>
    %39 = tpu.matmul %36, %38, %cst_29 {dimension_numbers = #tpu.dot_dimension_numbers<[1], [0], [0], [1], [0, 0, 1, 1], [], []>} : vector<8x8xbf16>, vector<8x32xbf16>, vector<8x32xf32> -> vector<8x32xf32>
    %40 = arith.addf %34, %39 : vector<8x32xf32>
    %41 = vector.extract_strided_slice %23 {offsets = [2, 0, 0], sizes = [1, 8, 8], strides = [1, 1, 1]} : vector<4x8x8xbf16> to vector<1x8x8xbf16>
    %42 = vector.shape_cast %41 : vector<1x8x8xbf16> to vector<8x8xbf16>
    %c2 = arith.constant 2 : index
    %c0_30 = arith.constant 0 : index
    %c0_31 = arith.constant 0 : index
    %43 = vector.load %arg7[%c2, %c0_30, %c0_31] : memref<4x8x32xbf16, #tpu.memory_space<vmem>>, vector<1x8x32xbf16>
    %44 = vector.shape_cast %43 : vector<1x8x32xbf16> to vector<8x32xbf16>
    %cst_32 = arith.constant dense<0.000000e+00> : vector<8x32xf32>
    %45 = tpu.matmul %42, %44, %cst_32 {dimension_numbers = #tpu.dot_dimension_numbers<[1], [0], [0], [1], [0, 0, 1, 1], [], []>} : vector<8x8xbf16>, vector<8x32xbf16>, vector<8x32xf32> -> vector<8x32xf32>
    %46 = arith.addf %40, %45 : vector<8x32xf32>
    %47 = vector.extract_strided_slice %23 {offsets = [3, 0, 0], sizes = [1, 8, 8], strides = [1, 1, 1]} : vector<4x8x8xbf16> to vector<1x8x8xbf16>
    %48 = vector.shape_cast %47 : vector<1x8x8xbf16> to vector<8x8xbf16>
    %c3 = arith.constant 3 : index
    %c0_33 = arith.constant 0 : index
    %c0_34 = arith.constant 0 : index
    %49 = vector.load %arg7[%c3, %c0_33, %c0_34] : memref<4x8x32xbf16, #tpu.memory_space<vmem>>, vector<1x8x32xbf16>
    %50 = vector.shape_cast %49 : vector<1x8x32xbf16> to vector<8x32xbf16>
    %cst_35 = arith.constant dense<0.000000e+00> : vector<8x32xf32>
    %51 = tpu.matmul %48, %50, %cst_35 {dimension_numbers = #tpu.dot_dimension_numbers<[1], [0], [0], [1], [0, 0, 1, 1], [], []>} : vector<8x8xbf16>, vector<8x32xbf16>, vector<8x32xf32> -> vector<8x32xf32>
    %52 = arith.addf %46, %51 : vector<8x32xf32>
    %c0_36 = arith.constant 0 : index
    %c0_37 = arith.constant 0 : index
    %53 = vector.load %arg9[%c0_36, %c0_37] : memref<1x32xf32, #tpu.memory_space<vmem>>, vector<1x32xf32>
    %c0_38 = arith.constant 0 : index
    %c0_39 = arith.constant 0 : index
    %54 = vector.load %arg10[%c0_38, %c0_39] : memref<1x32xf32, #tpu.memory_space<vmem>>, vector<1x32xf32>
    %cst_40 = arith.constant dense<0.000000e+00> : vector<8xf32>
    %55 = vector.multi_reduction <add>, %52, %cst_40 [1] : vector<8x32xf32> to vector<8xf32>
    %56 = vector.shape_cast %55 : vector<8xf32> to vector<8x1xf32>
    %cst_41 = arith.constant 3.200000e+01 : f32
    %57 = vector.broadcast %cst_41 : f32 to vector<8x1xf32>
    %58 = arith.divf %56, %57 : vector<8x1xf32>
    %59 = vector.broadcast %58 : vector<8x1xf32> to vector<8x32xf32>
    %60 = arith.subf %52, %59 : vector<8x32xf32>
    %61 = arith.mulf %60, %60 : vector<8x32xf32>
    %cst_42 = arith.constant dense<0.000000e+00> : vector<8xf32>
    %62 = vector.multi_reduction <add>, %61, %cst_42 [1] : vector<8x32xf32> to vector<8xf32>
    %63 = vector.shape_cast %62 : vector<8xf32> to vector<8x1xf32>
    %cst_43 = arith.constant 3.200000e+01 : f32
    %64 = vector.broadcast %cst_43 : f32 to vector<8x1xf32>
    %65 = arith.divf %63, %64 : vector<8x1xf32>
    %66 = vector.broadcast %58 : vector<8x1xf32> to vector<8x32xf32>
    %67 = arith.subf %52, %66 : vector<8x32xf32>
    %cst_44 = arith.constant 9.99999996E-13 : f32
    %68 = vector.broadcast %cst_44 : f32 to vector<8x1xf32>
    %69 = arith.addf %65, %68 : vector<8x1xf32>
    %70 = math.rsqrt %69 : vector<8x1xf32>
    %71 = vector.broadcast %70 : vector<8x1xf32> to vector<8x32xf32>
    %72 = arith.mulf %67, %71 : vector<8x32xf32>
    %73 = vector.broadcast %53 : vector<1x32xf32> to vector<8x32xf32>
    %74 = arith.mulf %72, %73 : vector<8x32xf32>
    %75 = vector.broadcast %54 : vector<1x32xf32> to vector<8x32xf32>
    %76 = arith.addf %74, %75 : vector<8x32xf32>
    %77 = arith.truncf %76 : vector<8x32xf32> to vector<8x32xbf16>
    %c0_45 = arith.constant 0 : index
    %c0_46 = arith.constant 0 : index
    %78 = vector.load %arg11[%c0_45, %c0_46] : memref<32x64xbf16, #tpu.memory_space<vmem>>, vector<32x64xbf16>
    %cst_47 = arith.constant dense<0.000000e+00> : vector<8x64xf32>
    %79 = tpu.matmul %77, %78, %cst_47 {dimension_numbers = #tpu.dot_dimension_numbers<[1], [0], [0], [1], [0, 0, 1, 1], [], []>} : vector<8x32xbf16>, vector<32x64xbf16>, vector<8x64xf32> -> vector<8x64xf32>
    %c0_48 = arith.constant 0 : index
    %c0_49 = arith.constant 0 : index
    %80 = vector.load %arg12[%c0_48, %c0_49] : memref<1x64xf32, #tpu.memory_space<vmem>>, vector<1x64xf32>
    %81 = vector.broadcast %80 : vector<1x64xf32> to vector<8x64xf32>
    %82 = arith.addf %79, %81 : vector<8x64xf32>
    %83 = arith.mulf %82, %82 : vector<8x64xf32>
    %84 = arith.mulf %82, %83 : vector<8x64xf32>
    %cst_50 = arith.constant 4.471500e-02 : f32
    %85 = vector.broadcast %cst_50 : f32 to vector<8x64xf32>
    %86 = arith.mulf %85, %84 : vector<8x64xf32>
    %87 = arith.addf %82, %86 : vector<8x64xf32>
    %cst_51 = arith.constant 0.797884583 : f32
    %88 = vector.broadcast %cst_51 : f32 to vector<8x64xf32>
    %89 = arith.mulf %88, %87 : vector<8x64xf32>
    %90 = math.tanh %89 : vector<8x64xf32>
    %cst_52 = arith.constant 1.000000e+00 : f32
    %91 = vector.broadcast %cst_52 : f32 to vector<8x64xf32>
    %92 = arith.addf %91, %90 : vector<8x64xf32>
    %cst_53 = arith.constant 5.000000e-01 : f32
    %93 = vector.broadcast %cst_53 : f32 to vector<8x64xf32>
    %94 = arith.mulf %93, %92 : vector<8x64xf32>
    %95 = arith.mulf %82, %94 : vector<8x64xf32>
    %96 = arith.truncf %95 : vector<8x64xf32> to vector<8x64xbf16>
    %c0_54 = arith.constant 0 : index
    %c0_55 = arith.constant 0 : index
    %97 = vector.load %arg13[%c0_54, %c0_55] : memref<64x32xbf16, #tpu.memory_space<vmem>>, vector<64x32xbf16>
    %cst_56 = arith.constant dense<0.000000e+00> : vector<8x32xf32>
    %98 = tpu.matmul %96, %97, %cst_56 {dimension_numbers = #tpu.dot_dimension_numbers<[1], [0], [0], [1], [0, 0, 1, 1], [], []>} : vector<8x64xbf16>, vector<64x32xbf16>, vector<8x32xf32> -> vector<8x32xf32>
    %c0_57 = arith.constant 0 : index
    %c0_58 = arith.constant 0 : index
    %99 = vector.load %arg14[%c0_57, %c0_58] : memref<1x32xf32, #tpu.memory_space<vmem>>, vector<1x32xf32>
    %100 = vector.broadcast %99 : vector<1x32xf32> to vector<8x32xf32>
    %101 = arith.addf %98, %100 : vector<8x32xf32>
    %102 = arith.addf %101, %76 : vector<8x32xf32>
    %c0_59 = arith.constant 0 : index
    %c0_60 = arith.constant 0 : index
    %103 = vector.load %arg15[%c0_59, %c0_60] : memref<1x32xf32, #tpu.memory_space<vmem>>, vector<1x32xf32>
    %c0_61 = arith.constant 0 : index
    %c0_62 = arith.constant 0 : index
    %104 = vector.load %arg16[%c0_61, %c0_62] : memref<1x32xf32, #tpu.memory_space<vmem>>, vector<1x32xf32>
    %cst_63 = arith.constant dense<0.000000e+00> : vector<8xf32>
    %105 = vector.multi_reduction <add>, %102, %cst_63 [1] : vector<8x32xf32> to vector<8xf32>
    %106 = vector.shape_cast %105 : vector<8xf32> to vector<8x1xf32>
    %cst_64 = arith.constant 3.200000e+01 : f32
    %107 = vector.broadcast %cst_64 : f32 to vector<8x1xf32>
    %108 = arith.divf %106, %107 : vector<8x1xf32>
    %109 = vector.broadcast %108 : vector<8x1xf32> to vector<8x32xf32>
    %110 = arith.subf %102, %109 : vector<8x32xf32>
    %111 = arith.mulf %110, %110 : vector<8x32xf32>
    %cst_65 = arith.constant dense<0.000000e+00> : vector<8xf32>
    %112 = vector.multi_reduction <add>, %111, %cst_65 [1] : vector<8x32xf32> to vector<8xf32>
    %113 = vector.shape_cast %112 : vector<8xf32> to vector<8x1xf32>
    %cst_66 = arith.constant 3.200000e+01 : f32
    %114 = vector.broadcast %cst_66 : f32 to vector<8x1xf32>
    %115 = arith.divf %113, %114 : vector<8x1xf32>
    %116 = vector.broadcast %108 : vector<8x1xf32> to vector<8x32xf32>
    %117 = arith.subf %102, %116 : vector<8x32xf32>
    %cst_67 = arith.constant 9.99999996E-13 : f32
    %118 = vector.broadcast %cst_67 : f32 to vector<8x1xf32>
    %119 = arith.addf %115, %118 : vector<8x1xf32>
    %120 = math.rsqrt %119 : vector<8x1xf32>
    %121 = vector.broadcast %120 : vector<8x1xf32> to vector<8x32xf32>
    %122 = arith.mulf %117, %121 : vector<8x32xf32>
    %123 = vector.broadcast %103 : vector<1x32xf32> to vector<8x32xf32>
    %124 = arith.mulf %122, %123 : vector<8x32xf32>
    %125 = vector.broadcast %104 : vector<1x32xf32> to vector<8x32xf32>
    %126 = arith.addf %124, %125 : vector<8x32xf32>
    %c0_68 = arith.constant 0 : index
    %c0_69 = arith.constant 0 : index
    %c0_70 = arith.constant 0 : index
    %127 = vector.load %arg17[%c0_68, %c0_69, %c0_70] : memref<1x8x32xf32, #tpu.memory_space<vmem>>, vector<1x8x32xf32>
    %128 = vector.shape_cast %127 : vector<1x8x32xf32> to vector<8x32xf32>
    %129 = vector.shape_cast %126 : vector<8x32xf32> to vector<1x8x32xf32>
    tpu.vector_store %arg17[%c0_68, %c0_69, %c0_70], %129 {strides = array<i32>} : memref<1x8x32xf32, #tpu.memory_space<vmem>>, vector<1x8x32xf32>,
    return
  }
  func.func @transform_0(%arg0: i32, %arg1: i32) -> (i32, i32, i32, i32) {
    %c0_i32 = arith.constant 0 : i32
    %c0_i32_0 = arith.constant 0 : i32
    %c0_i32_1 = arith.constant 0 : i32
    return %arg0, %c0_i32, %arg1, %c0_i32_0 : i32, i32, i32, i32
  }
  func.func @transform_1(%arg0: i32, %arg1: i32) -> (i32, i32, i32, i32) {
    %c0_i32 = arith.constant 0 : i32
    %c0_i32_0 = arith.constant 0 : i32
    %c0_i32_1 = arith.constant 0 : i32
    %c0_i32_2 = arith.constant 0 : i32
    return %arg0, %c0_i32, %c0_i32_0, %c0_i32_1 : i32, i32, i32, i32
  }
  func.func @transform_2(%arg0: i32, %arg1: i32) -> (i32, i32, i32, i32) {
    %c0_i32 = arith.constant 0 : i32
    %c0_i32_0 = arith.constant 0 : i32
    %c0_i32_1 = arith.constant 0 : i32
    %c0_i32_2 = arith.constant 0 : i32
    return %arg0, %c0_i32, %c0_i32_0, %c0_i32_1 : i32, i32, i32, i32
  }
  func.func @transform_3(%arg0: i32, %arg1: i32) -> (i32, i32, i32, i32) {
    %c0_i32 = arith.constant 0 : i32
    %c0_i32_0 = arith.constant 0 : i32
    %c0_i32_1 = arith.constant 0 : i32
    %c0_i32_2 = arith.constant 0 : i32
    return %arg0, %c0_i32, %c0_i32_0, %c0_i32_1 : i32, i32, i32, i32
  }
  func.func @transform_4(%arg0: i32, %arg1: i32) -> (i32, i32, i32) {
    %c0_i32 = arith.constant 0 : i32
    %c0_i32_0 = arith.constant 0 : i32
    return %arg0, %arg1, %c0_i32 : i32, i32, i32
  }
  func.func @transform_5(%arg0: i32, %arg1: i32) -> (i32, i32, i32) {
    %c0_i32 = arith.constant 0 : i32
    %c0_i32_0 = arith.constant 0 : i32
    %c0_i32_1 = arith.constant 0 : i32
    %c0_i32_2 = arith.constant 0 : i32
    return %c0_i32, %c0_i32_0, %c0_i32_1 : i32, i32, i32
  }
  func.func @transform_6(%arg0: i32, %arg1: i32) -> (i32, i32) {
    %c0_i32 = arith.constant 0 : i32
    %c0_i32_0 = arith.constant 0 : i32
    %c0_i32_1 = arith.constant 0 : i32
    return %c0_i32, %c0_i32_0 : i32, i32
  }
  func.func @transform_7(%arg0: i32, %arg1: i32) -> (i32, i32) {
    %c0_i32 = arith.constant 0 : i32
    %c0_i32_0 = arith.constant 0 : i32
    %c0_i32_1 = arith.constant 0 : i32
    return %c0_i32, %c0_i32_0 : i32, i32
  }
  func.func @transform_8(%arg0: i32, %arg1: i32) -> (i32, i32) {
    %c0_i32 = arith.constant 0 : i32
    %c0_i32_0 = arith.constant 0 : i32
    %c0_i32_1 = arith.constant 0 : i32
    return %c0_i32, %c0_i32_0 : i32, i32
  }
  func.func @transform_9(%arg0: i32, %arg1: i32) -> (i32, i32) {
    %c0_i32 = arith.constant 0 : i32
    %c0_i32_0 = arith.constant 0 : i32
    %c0_i32_1 = arith.constant 0 : i32
    return %c0_i32, %c0_i32_0 : i32, i32
  }
  func.func @transform_10(%arg0: i32, %arg1: i32) -> (i32, i32) {
    %c0_i32 = arith.constant 0 : i32
    %c0_i32_0 = arith.constant 0 : i32
    %c0_i32_1 = arith.constant 0 : i32
    return %c0_i32, %c0_i32_0 : i32, i32
  }
  func.func @transform_11(%arg0: i32, %arg1: i32) -> (i32, i32) {
    %c0_i32 = arith.constant 0 : i32
    %c0_i32_0 = arith.constant 0 : i32
    %c0_i32_1 = arith.constant 0 : i32
    return %c0_i32, %c0_i32_0 : i32, i32
  }
  func.func @transform_12(%arg0: i32, %arg1: i32) -> (i32, i32) {
    %c0_i32 = arith.constant 0 : i32
    %c0_i32_0 = arith.constant 0 : i32
    %c0_i32_1 = arith.constant 0 : i32
    return %c0_i32, %c0_i32_0 : i32, i32
  }
  func.func @transform_13(%arg0: i32, %arg1: i32) -> (i32, i32) {
    %c0_i32 = arith.constant 0 : i32
    %c0_i32_0 = arith.constant 0 : i32
    %c0_i32_1 = arith.constant 0 : i32
    return %c0_i32, %c0_i32_0 : i32, i32
  }
  func.func @transform_14(%arg0: i32, %arg1: i32) -> (i32, i32) {
    %c0_i32 = arith.constant 0 : i32
    %c0_i32_0 = arith.constant 0 : i32
    %c0_i32_1 = arith.constant 0 : i32
    return %c0_i32, %c0_i32_0 : i32, i32
  }
  func.func @transform_15(%arg0: i32, %arg1: i32) -> (i32, i32, i32) {
    %c0_i32 = arith.constant 0 : i32
    %c0_i32_0 = arith.constant 0 : i32
    return %arg0, %arg1, %c0_i32 : i32, i32, i32
  }
}

</mosaic_0001>

<llo_original>
// kernel: tpu_custom_call.1
$region0: #{tpu_custom_call.1}
  #allocation0 [shape = 'u32[]', space=smem, size = 0x4, offset = 0x4, fixed_abs, tag = 'smem constant byte address 0x4 - core index']
  #allocation1 [shape = 'u32[144,128]{1,0:T(1,128)}', space=vmem, size = 0x12000, scoped, tag = 'internal scratch']
  %s0 = inlined_call_operand.hbm [shape: f32[8,128], index: 0, kind: input, shape index: {}]
  %s1 = inlined_call_operand.hbm [shape: f32[8,128], index: 1, kind: output, shape index: {}]
  %s2 = sld [smem:[#allocation0]]
  $region18: #{tpu_custom_call.1} parent=0
    _
  %s4 = ssub.s32 1, %s2
  %s5 = scalar_select 0, %s4, %s2
  $region1: #{tpu_custom_call.1} parent=0
    #allocation2 [shape = 'u8[4096]{0}', space=vmem, size = 0x1000, scoped, tag = 'input window, operand 0, single buffered']
    #allocation3 [shape = 's32[1]{0}', space=sflag, size = 0x4, scoped, tag = 'scoped memory for tpu_custom_call.1']
    #allocation4 [shape = 's32[1]{0}', space=sflag, size = 0x4, scoped, tag = 'scoped memory for tpu_custom_call.1']
    #allocation5 [shape = 'u8[4096]{0}', space=vmem, size = 0x1000, scoped, tag = 'output window, operand 0, single buffered']
    %6 = vsyncpa [#allocation3], 0
    %7 = vsyncpa [#allocation4], 0
    // Predicated region
    $region2: #{tpu_custom_call.1} parent=1 // pred_check
      _
    $region3: #{tpu_custom_call.1} parent=1 // pred_check_branch
      %9 = sbr.rel (0) target = $region5
    $region4: #{tpu_custom_call.1} parent=1 // pred_region
      %s11 = ssub.s32 128, 128
      %12 = vsyncadd [#allocation3], %s11
      %s14 = sshll.u32 [#allocation2], 4
      %s15 = int_to_ptr.vmem [resolvable:$true] %s14
      %17 = dma.hbm_to_vmem [thread:$0]  %s0, 128, %s15, [#allocation3]
    $region5: #{tpu_custom_call.1} parent=1 // pred_fallthru
      _
    // Predicated region
    $region6: #{tpu_custom_call.1} parent=1 // pred_check
      _
    $region7: #{tpu_custom_call.1} parent=1 // pred_check_branch
      %19 = sbr.rel (0) target = $region9
    $region8: #{tpu_custom_call.1} parent=1 // pred_region
      %20 = dma.done [#allocation3], 128
    $region9: #{tpu_custom_call.1} parent=1 // pred_fallthru
      _
    %v21 = vld [vmem:[#allocation2] sm:$0xff]
    %22 = vst [vmem:[#allocation5] sm:$0xff] %v21
    // Predicated region
    $region10: #{tpu_custom_call.1} parent=1 // pred_check
      _
    $region11: #{tpu_custom_call.1} parent=1 // pred_check_branch
      %24 = sbr.rel (0) target = $region13
    $region12: #{tpu_custom_call.1} parent=1 // pred_region
      %s26 = ssub.s32 128, 128
      %27 = vsyncadd [#allocation4], %s26
      %s29 = sshll.u32 [#allocation5], 4
      %s30 = int_to_ptr.vmem [resolvable:$true] %s29
      %32 = dma.vmem_to_hbm [thread:$0]  %s30, 128, %s1, [#allocation4]
    $region13: #{tpu_custom_call.1} parent=1 // pred_fallthru
      _
    // Predicated region
    $region14: #{tpu_custom_call.1} parent=1 // pred_check
      _
    $region15: #{tpu_custom_call.1} parent=1 // pred_check_branch
      %34 = sbr.rel (0) target = $region17
    $region16: #{tpu_custom_call.1} parent=1 // pred_region
      %35 = dma.done [#allocation4], 128
    $region17: #{tpu_custom_call.1} parent=1 // pred_fallthru
      _
    %36 = vsyncpa [#allocation3], 1
    %37 = vsyncpa [#allocation4], 1

// kernel: tpu_custom_call.1
$region0: #{tpu_custom_call.1}
  #allocation0 [shape = 'u32[]', space=smem, size = 0x4, offset = 0x4, fixed_abs, tag = 'smem constant byte address 0x4 - core index']
  #allocation1 [shape = 'u32[144,128]{1,0:T(1,128)}', space=vmem, size = 0x12000, scoped, tag = 'internal scratch']
  %s0 = inlined_call_operand.vmem [shape: bf16[2,4,8,8], index: 0, kind: input, shape index: {}]
  %s1 = inlined_call_operand.hbm [shape: bf16[2,4,8,8], index: 1, kind: input, shape index: {}]
  %s2 = inlined_call_operand.hbm [shape: bf16[2,4,8,8], index: 2, kind: input, shape index: {}]
  %s3 = inlined_call_operand.hbm [shape: f32[2,4,1,8], index: 3, kind: input, shape index: {}]
  %s4 = inlined_call_operand.vmem [shape: f32[2,8,32], index: 4, kind: input, shape index: {}]
  %s5 = inlined_call_operand.hbm [shape: bf16[4,8,32], index: 5, kind: input, shape index: {}]
  %s6 = inlined_call_operand.vmem [shape: f32[1,32], index: 6, kind: input, shape index: {}]
  %s7 = inlined_call_operand.vmem [shape: f32[1,32], index: 7, kind: input, shape index: {}]
  %s8 = inlined_call_operand.hbm [shape: f32[1,32], index: 8, kind: input, shape index: {}]
  %s9 = inlined_call_operand.vmem [shape: bf16[32,64], index: 9, kind: input, shape index: {}]
  %s10 = inlined_call_operand.vmem [shape: f32[1,64], index: 10, kind: input, shape index: {}]
  %s11 = inlined_call_operand.vmem [shape: bf16[64,32], index: 11, kind: input, shape index: {}]
  %s12 = inlined_call_operand.vmem [shape: f32[1,32], index: 12, kind: input, shape index: {}]
  %s13 = inlined_call_operand.vmem [shape: f32[1,32], index: 13, kind: input, shape index: {}]
  %s14 = inlined_call_operand.vmem [shape: f32[1,32], index: 14, kind: input, shape index: {}]
  %s15 = inlined_call_operand.hbm [shape: f32[2,8,32], index: 15, kind: output, shape index: {}]
  %s16 = sld [smem:[#allocation0]]
  $region113: #{tpu_custom_call.1} parent=0
    _
  %s18 = ssub.s32 1, %s16
  %s19 = scalar_select 0, %s18, %s16
  $region1: #{tpu_custom_call.1} parent=0
    #allocation2 [shape = 'u8[16384]{0}', space=vmem, size = 0x4000, scoped, tag = 'input window, operand 1']
    #allocation3 [shape = 's32[2]{0}', space=sflag, size = 0x8, scoped, tag = 'scoped memory for tpu_custom_call.1']
    #allocation4 [shape = 's32[2]{0}', space=sflag, size = 0x8, scoped, tag = 'scoped memory for tpu_custom_call.1']
    #allocation5 [shape = 'u8[16384]{0}', space=vmem, size = 0x4000, scoped, tag = 'input window, operand 2']
    #allocation6 [shape = 's32[2]{0}', space=sflag, size = 0x8, scoped, tag = 'scoped memory for tpu_custom_call.1']
    #allocation7 [shape = 'u8[4096]{0}', space=vmem, size = 0x1000, scoped, tag = 'input window, operand 3']
    #allocation8 [shape = 'u8[8192]{0}', space=vmem, size = 0x2000, scoped, tag = 'input window, operand 5, single buffered']
    #allocation9 [shape = 's32[1]{0}', space=sflag, size = 0x4, scoped, tag = 'scoped memory for tpu_custom_call.1']
    #allocation10 [shape = 'u8[512]{0}', space=vmem, size = 0x400, scoped, tag = 'input window, operand 8, single buffered']
    #allocation11 [shape = 'u8[8192]{0}', space=vmem, size = 0x2000, scoped, tag = 'output window, operand 0']
    %20 = vsyncpa [#allocation3], 0
    %s21 = scalar_lea.sflag [#allocation3], 1
    %22 = vsyncpa %s21, 0
    %23 = vsyncpa [#allocation6], 0
    %s24 = scalar_lea.sflag [#allocation6], 1
    %25 = vsyncpa %s24, 0
    %26 = vsyncpa [#allocation9], 0
    %27 = vsyncpa [#allocation4], 0
    %s28 = scalar_lea.sflag [#allocation4], 1
    %29 = vsyncpa %s28, 0
    loop: start=0, step=1, limit=4
    $region2: #{tpu_custom_call.1} parent=1 // loop_pre_header
      _
    $region3: #{tpu_custom_call.1} parent=1 // loop_header
      %s31 = sphi 0, %s35
      %p32 = scmp.ge.s32.totalorder %s31, 4
      %s38 = sphi 0, %s50
      %s39 = sphi 0, %s46
      %s40 = sphi 0, %s38
      %s41 = sphi 0, %s39
      %s42 = sphi 0, %s40
      %s43 = sphi 0, %s41
      %s55 = sphi 0, %s57
      %s58 = sphi 0, %s55
      %s59 = sphi 0, %s58
      %s75 = sphi 0, %s59
      %s81 = sphi 0, %s83
      %s84 = sphi 0, %s81
      %s85 = sphi 0, %s84
      %s101 = sphi 0, %s85
      %s107 = sphi 0, %s109
      %s110 = sphi 0, %s107
      %s111 = sphi 0, %s110
      %s127 = sphi 0, %s111
      %s133 = sphi 0, %s135
      %s136 = sphi 0, %s133
      %s137 = sphi 0, %s136
      %s153 = sphi 0, %s137
      %s161 = sphi 0, %s163
      %s164 = sphi 0, %s161
      %s165 = sphi 0, %s164
      %s181 = sphi 0, %s165
      %s185 = sphi 0, %s185
      %s187 = sphi 0, %s185
      %s188 = sphi 0, %s187
      %s202 = sphi 0, %s188
      %s206 = sphi 0, %s206
      %s208 = sphi 0, %s206
      %s209 = sphi 0, %s208
      %s223 = sphi 0, %s209
      %s227 = sphi 0, %s227
      %s229 = sphi 0, %s227
      %s230 = sphi 0, %s229
      %s244 = sphi 0, %s230
      %s248 = sphi 0, %s248
      %s250 = sphi 0, %s248
      %s251 = sphi 0, %s250
      %s265 = sphi 0, %s251
      %s269 = sphi 0, %s269
      %s271 = sphi 0, %s269
      %s272 = sphi 0, %s271
      %s286 = sphi 0, %s272
      %s290 = sphi 0, %s290
      %s292 = sphi 0, %s290
      %s293 = sphi 0, %s292
      %s307 = sphi 0, %s293
      %s311 = sphi 0, %s311
      %s313 = sphi 0, %s311
      %s314 = sphi 0, %s313
      %s328 = sphi 0, %s314
      %s332 = sphi 0, %s332
      %s334 = sphi 0, %s332
      %s335 = sphi 0, %s334
      %s349 = sphi 0, %s335
      %s353 = sphi 0, %s353
      %s355 = sphi 0, %s353
      %s356 = sphi 0, %s355
      %s370 = sphi 0, %s356
      %s374 = sphi 0, %s374
      %s376 = sphi 0, %s374
      %s377 = sphi 0, %s376
      %s391 = sphi 0, %s377
      %s399 = sphi 0, %s401
      %s402 = sphi 0, %s399
      %s403 = sphi 0, %s402
      %s419 = sphi 0, %s403
    $region4: #{tpu_custom_call.1} parent=1 // loop_header_branch
      %34 = sbr.rel (%p32) target = $region8
    $region5: #{tpu_custom_call.1} parent=1 // loop_body
      %s36 = ssub.s32 %s31, 1
      %s37 = ssub.s32 %s31, 2
      %s44 = sadd.s32 1, %s39
      %p45 = scmp.ge.s32.totalorder %s44, 1
      %s46 = scalar_select %p45, 0, %s44
      %s47 = sadd.s32 1, %s38
      %s48 = scalar_select %p45, %s47, %s38
      %p49 = scmp.ge.s32.totalorder %s48, 2
      %s50 = scalar_select %p49, 0, %s48
      %s51 = ssub.s32 %s38, %s50
      %s52 = ssub.s32 %s39, %s46
      %s53 = sor.u32 %s51, %s52
      %p54 = scmp.eq.s32.totalorder %s53, 0
      %s56 = sadd.s32 %s55, 1
      %s57 = scalar_select %p54, %s55, %s56
      %p60 = pneg %p54
      %p61 = scmp.eq.s32.totalorder %s31, 1
      %p62 = por %p60, %p61
      %p63 = scmp.ne.s32.totalorder %s55, %s58
      %p64 = scmp.eq.s32.totalorder %s31, 0
      %p65 = por %p63, %p64
      %p66 = scmp.ne.s32.totalorder %s55, %s58
      %p67 = scmp.eq.s32.totalorder %s36, 1
      %p68 = por %p66, %p67
      %p69 = scmp.ne.s32.totalorder %s58, %s59
      %p70 = scmp.eq.s32.totalorder %s36, 0
      %p71 = por %p69, %p70
      %p72 = scmp.ne.s32.totalorder %s58, %s59
      %p73 = scmp.eq.s32.totalorder %s37, 1
      %p74 = por %p72, %p73
      %p76 = scmp.ne.s32.totalorder %s59, %s75
      %p77 = scmp.eq.s32.totalorder %s37, 0
      %p78 = por %p76, %p77
      %s79 = ssub.s32 %s38, %s50
      %p80 = scmp.eq.s32.totalorder %s79, 0
      %s82 = sadd.s32 %s81, 1
      %s83 = scalar_select %p80, %s81, %s82
      %p86 = pneg %p80
      %p87 = scmp.eq.s32.totalorder %s31, 1
      %p88 = por %p86, %p87
      %p89 = scmp.ne.s32.totalorder %s81, %s84
      %p90 = scmp.eq.s32.totalorder %s31, 0
      %p91 = por %p89, %p90
      %p92 = scmp.ne.s32.totalorder %s81, %s84
      %p93 = scmp.eq.s32.totalorder %s36, 1
      %p94 = por %p92, %p93
      %p95 = scmp.ne.s32.totalorder %s84, %s85
      %p96 = scmp.eq.s32.totalorder %s36, 0
      %p97 = por %p95, %p96
      %p98 = scmp.ne.s32.totalorder %s84, %s85
      %p99 = scmp.eq.s32.totalorder %s37, 1
      %p100 = por %p98, %p99
      %p102 = scmp.ne.s32.totalorder %s85, %s101
      %p103 = scmp.eq.s32.totalorder %s37, 0
      %p104 = por %p102, %p103
      %s105 = ssub.s32 %s38, %s50
      %p106 = scmp.eq.s32.totalorder %s105, 0
      %s108 = sadd.s32 %s107, 1
      %s109 = scalar_select %p106, %s107, %s108
      %p112 = pneg %p106
      %p113 = scmp.eq.s32.totalorder %s31, 1
      %p114 = por %p112, %p113
      %p115 = scmp.ne.s32.totalorder %s107, %s110
      %p116 = scmp.eq.s32.totalorder %s31, 0
      %p117 = por %p115, %p116
      %p118 = scmp.ne.s32.totalorder %s107, %s110
      %p119 = scmp.eq.s32.totalorder %s36, 1
      %p120 = por %p118, %p119
      %p121 = scmp.ne.s32.totalorder %s110, %s111
      %p122 = scmp.eq.s32.totalorder %s36, 0
      %p123 = por %p121, %p122
      %p124 = scmp.ne.s32.totalorder %s110, %s111
      %p125 = scmp.eq.s32.totalorder %s37, 1
      %p126 = por %p124, %p125
      %p128 = scmp.ne.s32.totalorder %s111, %s127
      %p129 = scmp.eq.s32.totalorder %s37, 0
      %p130 = por %p128, %p129
      %s131 = ssub.s32 %s38, %s50
      %p132 = scmp.eq.s32.totalorder %s131, 0
      %s134 = sadd.s32 %s133, 1
      %s135 = scalar_select %p132, %s133, %s134
      %p138 = pneg %p132
      %p139 = scmp.eq.s32.totalorder %s31, 1
      %p140 = por %p138, %p139
      %p141 = scmp.ne.s32.totalorder %s133, %s136
      %p142 = scmp.eq.s32.totalorder %s31, 0
      %p143 = por %p141, %p142
      %p144 = scmp.ne.s32.totalorder %s133, %s136
      %p145 = scmp.eq.s32.totalorder %s36, 1
      %p146 = por %p144, %p145
      %p147 = scmp.ne.s32.totalorder %s136, %s137
      %p148 = scmp.eq.s32.totalorder %s36, 0
      %p149 = por %p147, %p148
      %p150 = scmp.ne.s32.totalorder %s136, %s137
      %p151 = scmp.eq.s32.totalorder %s37, 1
      %p152 = por %p150, %p151
      %p154 = scmp.ne.s32.totalorder %s137, %s153
      %p155 = scmp.eq.s32.totalorder %s37, 0
      %p156 = por %p154, %p155
      %s157 = ssub.s32 %s38, %s50
      %s158 = ssub.s32 %s39, %s46
      %s159 = sor.u32 %s157, %s158
      %p160 = scmp.eq.s32.totalorder %s159, 0
      %s162 = sadd.s32 %s161, 1
      %s163 = scalar_select %p160, %s161, %s162
      %p166 = pneg %p160
      %p167 = scmp.eq.s32.totalorder %s31, 1
      %p168 = por %p166, %p167
      %p169 = scmp.ne.s32.totalorder %s161, %s164
      %p170 = scmp.eq.s32.totalorder %s31, 0
      %p171 = por %p169, %p170
      %p172 = scmp.ne.s32.totalorder %s161, %s164
      %p173 = scmp.eq.s32.totalorder %s36, 1
      %p174 = por %p172, %p173
      %p175 = scmp.ne.s32.totalorder %s164, %s165
      %p176 = scmp.eq.s32.totalorder %s36, 0
      %p177 = por %p175, %p176
      %p178 = scmp.ne.s32.totalorder %s164, %s165
      %p179 = scmp.eq.s32.totalorder %s37, 1
      %p180 = por %p178, %p179
      %p182 = scmp.ne.s32.totalorder %s165, %s181
      %p183 = scmp.eq.s32.totalorder %s37, 0
      %p184 = por %p182, %p183
      %s186 = sadd.s32 %s185, 1
      %p189 = scmp.eq.s32.totalorder %s31, 1
      %p190 = scmp.ne.s32.totalorder %s185, %s187
      %p191 = scmp.eq.s32.totalorder %s31, 0
      %p192 = por %p190, %p191
      %p193 = scmp.ne.s32.totalorder %s185, %s187
      %p194 = scmp.eq.s32.totalorder %s36, 1
      %p195 = por %p193, %p194
      %p196 = scmp.ne.s32.totalorder %s187, %s188
      %p197 = scmp.eq.s32.totalorder %s36, 0
      %p198 = por %p196, %p197
      %p199 = scmp.ne.s32.totalorder %s187, %s188
      %p200 = scmp.eq.s32.totalorder %s37, 1
      %p201 = por %p199, %p200
      %p203 = scmp.ne.s32.totalorder %s188, %s202
      %p204 = scmp.eq.s32.totalorder %s37, 0
      %p205 = por %p203, %p204
      %s207 = sadd.s32 %s206, 1
      %p210 = scmp.eq.s32.totalorder %s31, 1
      %p211 = scmp.ne.s32.totalorder %s206, %s208
      %p212 = scmp.eq.s32.totalorder %s31, 0
      %p213 = por %p211, %p212
      %p214 = scmp.ne.s32.totalorder %s206, %s208
      %p215 = scmp.eq.s32.totalorder %s36, 1
      %p216 = por %p214, %p215
      %p217 = scmp.ne.s32.totalorder %s208, %s209
      %p218 = scmp.eq.s32.totalorder %s36, 0
      %p219 = por %p217, %p218
      %p220 = scmp.ne.s32.totalorder %s208, %s209
      %p221 = scmp.eq.s32.totalorder %s37, 1
      %p222 = por %p220, %p221
      %p224 = scmp.ne.s32.totalorder %s209, %s223
      %p225 = scmp.eq.s32.totalorder %s37, 0
      %p226 = por %p224, %p225
      %s228 = sadd.s32 %s227, 1
      %p231 = scmp.eq.s32.totalorder %s31, 1
      %p232 = scmp.ne.s32.totalorder %s227, %s229
      %p233 = scmp.eq.s32.totalorder %s31, 0
      %p234 = por %p232, %p233
      %p235 = scmp.ne.s32.totalorder %s227, %s229
      %p236 = scmp.eq.s32.totalorder %s36, 1
      %p237 = por %p235, %p236
      %p238 = scmp.ne.s32.totalorder %s229, %s230
      %p239 = scmp.eq.s32.totalorder %s36, 0
      %p240 = por %p238, %p239
      %p241 = scmp.ne.s32.totalorder %s229, %s230
      %p242 = scmp.eq.s32.totalorder %s37, 1
      %p243 = por %p241, %p242
      %p245 = scmp.ne.s32.totalorder %s230, %s244
      %p246 = scmp.eq.s32.totalorder %s37, 0
      %p247 = por %p245, %p246
      %s249 = sadd.s32 %s248, 1
      %p252 = scmp.eq.s32.totalorder %s31, 1
      %p253 = scmp.ne.s32.totalorder %s248, %s250
      %p254 = scmp.eq.s32.totalorder %s31, 0
      %p255 = por %p253, %p254
      %p256 = scmp.ne.s32.totalorder %s248, %s250
      %p257 = scmp.eq.s32.totalorder %s36, 1
      %p258 = por %p256, %p257
      %p259 = scmp.ne.s32.totalorder %s250, %s251
      %p260 = scmp.eq.s32.totalorder %s36, 0
      %p261 = por %p259, %p260
      %p262 = scmp.ne.s32.totalorder %s250, %s251
      %p263 = scmp.eq.s32.totalorder %s37, 1
      %p264 = por %p262, %p263
      %p266 = scmp.ne.s32.totalorder %s251, %s265
      %p267 = scmp.eq.s32.totalorder %s37, 0
      %p268 = por %p266, %p267
      %s270 = sadd.s32 %s269, 1
      %p273 = scmp.eq.s32.totalorder %s31, 1
      %p274 = scmp.ne.s32.totalorder %s269, %s271
      %p275 = scmp.eq.s32.totalorder %s31, 0
      %p276 = por %p274, %p275
      %p277 = scmp.ne.s32.totalorder %s269, %s271
      %p278 = scmp.eq.s32.totalorder %s36, 1
      %p279 = por %p277, %p278
      %p280 = scmp.ne.s32.totalorder %s271, %s272
      %p281 = scmp.eq.s32.totalorder %s36, 0
      %p282 = por %p280, %p281
      %p283 = scmp.ne.s32.totalorder %s271, %s272
      %p284 = scmp.eq.s32.totalorder %s37, 1
      %p285 = por %p283, %p284
      %p287 = scmp.ne.s32.totalorder %s272, %s286
      %p288 = scmp.eq.s32.totalorder %s37, 0
      %p289 = por %p287, %p288
      %s291 = sadd.s32 %s290, 1
      %p294 = scmp.eq.s32.totalorder %s31, 1
      %p295 = scmp.ne.s32.totalorder %s290, %s292
      %p296 = scmp.eq.s32.totalorder %s31, 0
      %p297 = por %p295, %p296
      %p298 = scmp.ne.s32.totalorder %s290, %s292
      %p299 = scmp.eq.s32.totalorder %s36, 1
      %p300 = por %p298, %p299
      %p301 = scmp.ne.s32.totalorder %s292, %s293
      %p302 = scmp.eq.s32.totalorder %s36, 0
      %p303 = por %p301, %p302
      %p304 = scmp.ne.s32.totalorder %s292, %s293
      %p305 = scmp.eq.s32.totalorder %s37, 1
      %p306 = por %p304, %p305
      %p308 = scmp.ne.s32.totalorder %s293, %s307
      %p309 = scmp.eq.s32.totalorder %s37, 0
      %p310 = por %p308, %p309
      %s312 = sadd.s32 %s311, 1
      %p315 = scmp.eq.s32.totalorder %s31, 1
      %p316 = scmp.ne.s32.totalorder %s311, %s313
      %p317 = scmp.eq.s32.totalorder %s31, 0
      %p318 = por %p316, %p317
      %p319 = scmp.ne.s32.totalorder %s311, %s313
      %p320 = scmp.eq.s32.totalorder %s36, 1
      %p321 = por %p319, %p320
      %p322 = scmp.ne.s32.totalorder %s313, %s314
      %p323 = scmp.eq.s32.totalorder %s36, 0
      %p324 = por %p322, %p323
      %p325 = scmp.ne.s32.totalorder %s313, %s314
      %p326 = scmp.eq.s32.totalorder %s37, 1
      %p327 = por %p325, %p326
      %p329 = scmp.ne.s32.totalorder %s314, %s328
      %p330 = scmp.eq.s32.totalorder %s37, 0
      %p331 = por %p329, %p330
      %s333 = sadd.s32 %s332, 1
      %p336 = scmp.eq.s32.totalorder %s31, 1
      %p337 = scmp.ne.s32.totalorder %s332, %s334
      %p338 = scmp.eq.s32.totalorder %s31, 0
      %p339 = por %p337, %p338
      %p340 = scmp.ne.s32.totalorder %s332, %s334
      %p341 = scmp.eq.s32.totalorder %s36, 1
      %p342 = por %p340, %p341
      %p343 = scmp.ne.s32.totalorder %s334, %s335
      %p344 = scmp.eq.s32.totalorder %s36, 0
      %p345 = por %p343, %p344
      %p346 = scmp.ne.s32.totalorder %s334, %s335
      %p347 = scmp.eq.s32.totalorder %s37, 1
      %p348 = por %p346, %p347
      %p350 = scmp.ne.s32.totalorder %s335, %s349
      %p351 = scmp.eq.s32.totalorder %s37, 0
      %p352 = por %p350, %p351
      %s354 = sadd.s32 %s353, 1
      %p357 = scmp.eq.s32.totalorder %s31, 1
      %p358 = scmp.ne.s32.totalorder %s353, %s355
      %p359 = scmp.eq.s32.totalorder %s31, 0
      %p360 = por %p358, %p359
      %p361 = scmp.ne.s32.totalorder %s353, %s355
      %p362 = scmp.eq.s32.totalorder %s36, 1
      %p363 = por %p361, %p362
      %p364 = scmp.ne.s32.totalorder %s355, %s356
      %p365 = scmp.eq.s32.totalorder %s36, 0
      %p366 = por %p364, %p365
      %p367 = scmp.ne.s32.totalorder %s355, %s356
      %p368 = scmp.eq.s32.totalorder %s37, 1
      %p369 = por %p367, %p368
      %p371 = scmp.ne.s32.totalorder %s356, %s370
      %p372 = scmp.eq.s32.totalorder %s37, 0
      %p373 = por %p371, %p372
      %s375 = sadd.s32 %s374, 1
      %p378 = scmp.eq.s32.totalorder %s31, 1
      %p379 = scmp.ne.s32.totalorder %s374, %s376
      %p380 = scmp.eq.s32.totalorder %s31, 0
      %p381 = por %p379, %p380
      %p382 = scmp.ne.s32.totalorder %s374, %s376
      %p383 = scmp.eq.s32.totalorder %s36, 1
      %p384 = por %p382, %p383
      %p385 = scmp.ne.s32.totalorder %s376, %s377
      %p386 = scmp.eq.s32.totalorder %s36, 0
      %p387 = por %p385, %p386
      %p388 = scmp.ne.s32.totalorder %s376, %s377
      %p389 = scmp.eq.s32.totalorder %s37, 1
      %p390 = por %p388, %p389
      %p392 = scmp.ne.s32.totalorder %s377, %s391
      %p393 = scmp.eq.s32.totalorder %s37, 0
      %p394 = por %p392, %p393
      %s395 = ssub.s32 %s38, %s50
      %s396 = ssub.s32 %s39, %s46
      %s397 = sor.u32 %s395, %s396
      %p398 = scmp.eq.s32.totalorder %s397, 0
      %s400 = sadd.s32 %s399, 1
      %s401 = scalar_select %p398, %s399, %s400
      %p404 = pneg %p398
      %p405 = scmp.eq.s32.totalorder %s31, 1
      %p406 = por %p404, %p405
      %p407 = scmp.ne.s32.totalorder %s399, %s402
      %p408 = scmp.eq.s32.totalorder %s31, 0
      %p409 = por %p407, %p408
      %p410 = scmp.ne.s32.totalorder %s399, %s402
      %p411 = scmp.eq.s32.totalorder %s36, 1
      %p412 = por %p410, %p411
      %p413 = scmp.ne.s32.totalorder %s402, %s403
      %p414 = scmp.eq.s32.totalorder %s36, 0
      %p415 = por %p413, %p414
      %p416 = scmp.ne.s32.totalorder %s402, %s403
      %p417 = scmp.eq.s32.totalorder %s37, 1
      %p418 = por %p416, %p417
      %p420 = scmp.ne.s32.totalorder %s403, %s419
      %p421 = scmp.eq.s32.totalorder %s37, 0
      %p422 = por %p420, %p421
      %p423 = scmp.le.s32.totalorder 1, %s31
      %p424 = scmp.lt.s32.totalorder %s31, 3
      %p425 = pnand %p423, %p424
      %p426 = pneg %p425
      // Predicated region
      $region9: #{tpu_custom_call.1} parent=5 // pred_check
        _
      $region10: #{tpu_custom_call.1} parent=5 // pred_check_branch
        %428 = sbr.rel (%p425) target = $region12
      $region11: #{tpu_custom_call.1} parent=5 // pred_region
        %s429 = ssub.s32 %s31, 1
        // Predicated region
        $region13: #{tpu_custom_call.1} parent=11 // pred_check
          %p430 = pneg %p198
        $region14: #{tpu_custom_call.1} parent=11 // pred_check_branch
          %432 = sbr.rel (%p430) target = $region16
        $region15: #{tpu_custom_call.1} parent=11 // pred_region
          %s434 = ssub.s32 256, 256
          %435 = vsyncadd [#allocation9], %s434
          %s436 = sshll.u32 [#allocation8], 4
          %s437 = int_to_ptr.vmem [resolvable:$true] %s436
          %442 = dma.hbm_to_vmem [thread:$0]  %s5, 256, %s437, [#allocation9], 64, 64, 4
        $region16: #{tpu_custom_call.1} parent=11 // pred_fallthru
          _
        // Predicated region
        $region17: #{tpu_custom_call.1} parent=11 // pred_check
          %p443 = pneg %p219
        $region18: #{tpu_custom_call.1} parent=11 // pred_check_branch
          %445 = sbr.rel (%p443) target = $region20
        $region19: #{tpu_custom_call.1} parent=11 // pred_region
          _
        $region20: #{tpu_custom_call.1} parent=11 // pred_fallthru
          _
        // Predicated region
        $region21: #{tpu_custom_call.1} parent=11 // pred_check
          %p446 = pneg %p240
        $region22: #{tpu_custom_call.1} parent=11 // pred_check_branch
          %448 = sbr.rel (%p446) target = $region24
        $region23: #{tpu_custom_call.1} parent=11 // pred_region
          _
        $region24: #{tpu_custom_call.1} parent=11 // pred_fallthru
          _
        // Predicated region
        $region25: #{tpu_custom_call.1} parent=11 // pred_check
          %p449 = pneg %p261
        $region26: #{tpu_custom_call.1} parent=11 // pred_check_branch
          %451 = sbr.rel (%p449) target = $region28
        $region27: #{tpu_custom_call.1} parent=11 // pred_region
          %s453 = ssub.s32 16, 16
          %454 = vsyncadd [#allocation9], %s453
          %s456 = sshll.u32 [#allocation10], 4
          %s457 = int_to_ptr.vmem [resolvable:$true] %s456
          %459 = dma.hbm_to_vmem [thread:$0]  %s8, 16, %s457, [#allocation9]
        $region28: #{tpu_custom_call.1} parent=11 // pred_fallthru
          _
        // Predicated region
        $region29: #{tpu_custom_call.1} parent=11 // pred_check
          %p460 = pneg %p282
        $region30: #{tpu_custom_call.1} parent=11 // pred_check_branch
          %462 = sbr.rel (%p460) target = $region32
        $region31: #{tpu_custom_call.1} parent=11 // pred_region
          _
        $region32: #{tpu_custom_call.1} parent=11 // pred_fallthru
          _
        // Predicated region
        $region33: #{tpu_custom_call.1} parent=11 // pred_check
          %p463 = pneg %p303
        $region34: #{tpu_custom_call.1} parent=11 // pred_check_branch
          %465 = sbr.rel (%p463) target = $region36
        $region35: #{tpu_custom_call.1} parent=11 // pred_region
          _
        $region36: #{tpu_custom_call.1} parent=11 // pred_fallthru
          _
        // Predicated region
        $region37: #{tpu_custom_call.1} parent=11 // pred_check
          %p466 = pneg %p324
        $region38: #{tpu_custom_call.1} parent=11 // pred_check_branch
          %468 = sbr.rel (%p466) target = $region40
        $region39: #{tpu_custom_call.1} parent=11 // pred_region
          _
        $region40: #{tpu_custom_call.1} parent=11 // pred_fallthru
          _
        // Predicated region
        $region41: #{tpu_custom_call.1} parent=11 // pred_check
          %p469 = pneg %p345
        $region42: #{tpu_custom_call.1} parent=11 // pred_check_branch
          %471 = sbr.rel (%p469) target = $region44
        $region43: #{tpu_custom_call.1} parent=11 // pred_region
          _
        $region44: #{tpu_custom_call.1} parent=11 // pred_fallthru
          _
        // Predicated region
        $region45: #{tpu_custom_call.1} parent=11 // pred_check
          %p472 = pneg %p366
        $region46: #{tpu_custom_call.1} parent=11 // pred_check_branch
          %474 = sbr.rel (%p472) target = $region48
        $region47: #{tpu_custom_call.1} parent=11 // pred_region
          _
        $region48: #{tpu_custom_call.1} parent=11 // pred_fallthru
          _
        // Predicated region
        $region49: #{tpu_custom_call.1} parent=11 // pred_check
          %p475 = pneg %p387
        $region50: #{tpu_custom_call.1} parent=11 // pred_check_branch
          %477 = sbr.rel (%p475) target = $region52
        $region51: #{tpu_custom_call.1} parent=11 // pred_region
          _
        $region52: #{tpu_custom_call.1} parent=11 // pred_fallthru
          _
      $region12: #{tpu_custom_call.1} parent=5 // pred_fallthru
        _
      %p478 = scmp.lt.s32.totalorder %s31, 2
      // Predicated region
      $region53: #{tpu_custom_call.1} parent=5 // pred_check
        %p479 = pneg %p478
      $region54: #{tpu_custom_call.1} parent=5 // pred_check_branch
        %481 = sbr.rel (%p479) target = $region56
      $region55: #{tpu_custom_call.1} parent=5 // pred_region
        // Predicated region
        $region57: #{tpu_custom_call.1} parent=55 // pred_check
          %p482 = pneg %p65
        $region58: #{tpu_custom_call.1} parent=55 // pred_check_branch
          %484 = sbr.rel (%p482) target = $region60
        $region59: #{tpu_custom_call.1} parent=55 // pred_region
          %p485 = scmp.lt.s32.totalorder %s38, 1
          %s486 = scalar_select %p485, %s38, 1
          %p487 = scmp.lt.s32.totalorder %s39, 0
          %s488 = scalar_select %p487, %s39, 0
          %s489 = smul.addr %s486, 4
          %s490 = sadd.s32 %s488, %s489
          %s491 = smul.addr %s490, 4
          %s492 = scalar_lea.vmem %s0, %s491
        $region60: #{tpu_custom_call.1} parent=55 // pred_fallthru
          _
        // Predicated region
        $region61: #{tpu_custom_call.1} parent=55 // pred_check
          %p493 = pneg %p91
        $region62: #{tpu_custom_call.1} parent=55 // pred_check_branch
          %495 = sbr.rel (%p493) target = $region64
        $region63: #{tpu_custom_call.1} parent=55 // pred_region
          %s496 = sand.u32 %s81, 1
          %s497 = scalar_lea.sflag [#allocation3], %s496
          %s498 = sand.u32 %s81, 1
          %s499 = smul.addr %s498, 16
          %s500 = scalar_lea.vmem [#allocation2], %s499
          %s502 = ssub.s32 256, 256
          %503 = vsyncadd %s497, %s502
          %s504 = smul.addr %s38, 4
          %s505 = smul.addr %s504, 64
          %s506 = scalar_lea.hbm %s1, %s505
          %s507 = sshll.u32 %s500, 4
          %s508 = int_to_ptr.vmem [resolvable:$true] %s507
          %513 = dma.hbm_to_vmem [thread:$0]  %s506, 256, %s508, %s497, 64, 64, 4
        $region64: #{tpu_custom_call.1} parent=55 // pred_fallthru
          _
        // Predicated region
        $region65: #{tpu_custom_call.1} parent=55 // pred_check
          %p514 = pneg %p117
        $region66: #{tpu_custom_call.1} parent=55 // pred_check_branch
          %516 = sbr.rel (%p514) target = $region68
        $region67: #{tpu_custom_call.1} parent=55 // pred_region
          %s517 = sand.u32 %s31, 1
          %s518 = scalar_lea.sflag [#allocation6], %s517
          %s519 = sand.u32 %s107, 1
          %s520 = smul.addr %s519, 16
          %s521 = scalar_lea.vmem [#allocation5], %s520
          %s523 = ssub.s32 256, 256
          %524 = vsyncadd %s518, %s523
          %s525 = smul.addr %s38, 4
          %s526 = smul.addr %s525, 64
          %s527 = scalar_lea.hbm %s2, %s526
          %s528 = sshll.u32 %s521, 4
          %s529 = int_to_ptr.vmem [resolvable:$true] %s528
          %534 = dma.hbm_to_vmem [thread:$0]  %s527, 256, %s529, %s518, 64, 64, 4
        $region68: #{tpu_custom_call.1} parent=55 // pred_fallthru
          _
        // Predicated region
        $region69: #{tpu_custom_call.1} parent=55 // pred_check
          %p535 = pneg %p143
        $region70: #{tpu_custom_call.1} parent=55 // pred_check_branch
          %537 = sbr.rel (%p535) target = $region72
        $region71: #{tpu_custom_call.1} parent=55 // pred_region
          %s538 = sand.u32 %s31, 1
          %s539 = scalar_lea.sflag [#allocation6], %s538
          %s540 = sand.u32 %s133, 1
          %s541 = smul.addr %s540, 4
          %s542 = scalar_lea.vmem [#allocation7], %s541
          %s544 = ssub.s32 64, 64
          %545 = vsyncadd %s539, %s544
          %s546 = smul.addr %s38, 4
          %s547 = smul.addr %s546, 16
          %s548 = scalar_lea.hbm %s3, %s547
          %s549 = sshll.u32 %s542, 4
          %s550 = int_to_ptr.vmem [resolvable:$true] %s549
          %555 = dma.hbm_to_vmem [thread:$0]  %s548, 64, %s550, %s539, 16, 16, 1
        $region72: #{tpu_custom_call.1} parent=55 // pred_fallthru
          _
        // Predicated region
        $region73: #{tpu_custom_call.1} parent=55 // pred_check
          %p556 = pneg %p171
        $region74: #{tpu_custom_call.1} parent=55 // pred_check_branch
          %558 = sbr.rel (%p556) target = $region76
        $region75: #{tpu_custom_call.1} parent=55 // pred_region
          %p559 = scmp.lt.s32.totalorder %s38, 1
          %s560 = scalar_select %p559, %s38, 1
          %p561 = scmp.lt.s32.totalorder %s39, 0
          %s562 = scalar_select %p561, %s39, 0
          %s563 = sadd.s32 %s562, %s560
          %s564 = smul.addr %s563, 8
          %s565 = scalar_lea.vmem %s4, %s564
        $region76: #{tpu_custom_call.1} parent=55 // pred_fallthru
          _
      $region56: #{tpu_custom_call.1} parent=5 // pred_fallthru
        _
      %p566 = scmp.le.s32.totalorder 1, %s31
      %p567 = scmp.lt.s32.totalorder %s31, 3
      %p568 = pnand %p566, %p567
      %p569 = pneg %p568
      // Predicated region
      $region77: #{tpu_custom_call.1} parent=5 // pred_check
        _
      $region78: #{tpu_custom_call.1} parent=5 // pred_check_branch
        %571 = sbr.rel (%p568) target = $region80
      $region79: #{tpu_custom_call.1} parent=5 // pred_region
        %s572 = ssub.s32 %s31, 1
        %s573 = sand.u32 %s84, 1
        %s574 = scalar_lea.sflag [#allocation3], %s573
        %s575 = sand.u32 %s84, 1
        %s576 = smul.addr %s575, 16
        %s577 = scalar_lea.vmem [#allocation2], %s576
        // Predicated region
        $region81: #{tpu_custom_call.1} parent=79 // pred_check
          %p578 = pneg %p97
        $region82: #{tpu_custom_call.1} parent=79 // pred_check_branch
          %580 = sbr.rel (%p578) target = $region84
        $region83: #{tpu_custom_call.1} parent=79 // pred_region
          %581 = dma.done %s574, 256
        $region84: #{tpu_custom_call.1} parent=79 // pred_fallthru
          _
        %s582 = sand.u32 %s36, 1
        %s583 = scalar_lea.sflag [#allocation6], %s582
        %s584 = sand.u32 %s110, 1
        %s585 = smul.addr %s584, 16
        %s586 = scalar_lea.vmem [#allocation5], %s585
        // Predicated region
        $region85: #{tpu_custom_call.1} parent=79 // pred_check
          %p587 = pneg %p123
        $region86: #{tpu_custom_call.1} parent=79 // pred_check_branch
          %589 = sbr.rel (%p587) target = $region88
        $region87: #{tpu_custom_call.1} parent=79 // pred_region
          %590 = dma.done %s583, 256
        $region88: #{tpu_custom_call.1} parent=79 // pred_fallthru
          _
        %s591 = sand.u32 %s36, 1
        %s592 = scalar_lea.sflag [#allocation6], %s591
        %s593 = sand.u32 %s136, 1
        %s594 = smul.addr %s593, 4
        %s595 = scalar_lea.vmem [#allocation7], %s594
        // Predicated region
        $region89: #{tpu_custom_call.1} parent=79 // pred_check
          %p596 = pneg %p149
        $region90: #{tpu_custom_call.1} parent=79 // pred_check_branch
          %598 = sbr.rel (%p596) target = $region92
        $region91: #{tpu_custom_call.1} parent=79 // pred_region
          %599 = dma.done %s592, 64
        $region92: #{tpu_custom_call.1} parent=79 // pred_fallthru
          _
        // Predicated region
        $region93: #{tpu_custom_call.1} parent=79 // pred_check
          %p600 = pneg %p198
        $region94: #{tpu_custom_call.1} parent=79 // pred_check_branch
          %602 = sbr.rel (%p600) target = $region96
        $region95: #{tpu_custom_call.1} parent=79 // pred_region
          %603 = dma.done [#allocation9], 256
        $region96: #{tpu_custom_call.1} parent=79 // pred_fallthru
          _
        // Predicated region
        $region97: #{tpu_custom_call.1} parent=79 // pred_check
          %p604 = pneg %p261
        $region98: #{tpu_custom_call.1} parent=79 // pred_check_branch
          %606 = sbr.rel (%p604) target = $region100
        $region99: #{tpu_custom_call.1} parent=79 // pred_region
          %607 = dma.done [#allocation9], 16
        $region100: #{tpu_custom_call.1} parent=79 // pred_fallthru
          _
        %p608 = scmp.lt.s32.totalorder %s40, 1
        %s609 = scalar_select %p608, %s40, 1
        %p610 = scmp.lt.s32.totalorder %s41, 0
        %s611 = scalar_select %p610, %s41, 0
        %s612 = smul.addr %s609, 4
        %s613 = sadd.s32 %s611, %s612
        %s614 = smul.addr %s613, 4
        %s615 = scalar_lea.vmem %s0, %s614
        %p616 = pneg %p71
        %p617 = pneg %p68
        %s618 = sand.u32 %s84, 1
        %s619 = scalar_lea.sflag [#allocation3], %s618
        %s620 = sand.u32 %s84, 1
        %s621 = smul.addr %s620, 16
        %s622 = scalar_lea.vmem [#allocation2], %s621
        %p623 = pneg %p97
        %p624 = pneg %p94
        %s625 = sand.u32 %s36, 1
        %s626 = scalar_lea.sflag [#allocation6], %s625
        %s627 = sand.u32 %s110, 1
        %s628 = smul.addr %s627, 16
        %s629 = scalar_lea.vmem [#allocation5], %s628
        %p630 = pneg %p123
        %p631 = pneg %p120
        %s632 = sand.u32 %s36, 1
        %s633 = scalar_lea.sflag [#allocation6], %s632
        %s634 = sand.u32 %s136, 1
        %s635 = smul.addr %s634, 4
        %s636 = scalar_lea.vmem [#allocation7], %s635
        %p637 = pneg %p149
        %p638 = pneg %p146
        %p639 = scmp.lt.s32.totalorder %s40, 1
        %s640 = scalar_select %p639, %s40, 1
        %p641 = scmp.lt.s32.totalorder %s41, 0
        %s642 = scalar_select %p641, %s41, 0
        %s643 = sadd.s32 %s642, %s640
        %s644 = smul.addr %s643, 8
        %s645 = scalar_lea.vmem %s4, %s644
        %p646 = pneg %p177
        %p647 = pneg %p174
        %p648 = pneg %p198
        %p649 = pneg %p195
        %p650 = pneg %p219
        %p651 = pneg %p216
        %p652 = pneg %p240
        %p653 = pneg %p237
        %p654 = pneg %p261
        %p655 = pneg %p258
        %p656 = pneg %p282
        %p657 = pneg %p279
        %p658 = pneg %p303
        %p659 = pneg %p300
        %p660 = pneg %p324
        %p661 = pneg %p321
        %p662 = pneg %p345
        %p663 = pneg %p342
        %p664 = pneg %p366
        %p665 = pneg %p363
        %p666 = pneg %p387
        %p667 = pneg %p384
        %p668 = pneg %p415
        %p669 = pneg %p412
        %s670 = sand.u32 %s402, 1
        %s671 = scalar_lea.sflag [#allocation4], %s670
        %s672 = sand.u32 %s402, 1
        %s673 = smul.addr %s672, 8
        %s674 = scalar_lea.vmem [#allocation11], %s673
        %p675 = scmp.lt.s32.totalorder %s40, 1
        %s676 = scalar_select %p675, %s40, 1
        %p677 = scmp.lt.s32.totalorder %s41, 0
        %s678 = scalar_select %p677, %s41, 0
        %s679 = smul.addr %s676, 4
        %s680 = sadd.s32 %s678, %s679
        %s681 = smul.addr %s680, 4
        %s682 = scalar_lea.vmem %s0, %s681
        %p683 = scmp.lt.s32.totalorder %s40, 1
        %s684 = scalar_select %p683, %s40, 1
        %p685 = scmp.lt.s32.totalorder %s41, 0
        %s686 = scalar_select %p685, %s41, 0
        %s687 = sadd.s32 %s686, %s684
        %s688 = smul.addr %s687, 8
        %s689 = scalar_lea.vmem %s4, %s688
        %v691 = vld [vmem:[%s682] sm:$0xf]
        %v692 = vld [vmem:[%s682 + $0x4] sm:$0xf]
        %v693 = vld [vmem:[%s682 + $0x8] sm:$0xf]
        %v694 = vld [vmem:[%s682 + $0xc] sm:$0xf]
        %v695 = vld [vmem:[%s577] sm:$0xf]
        %v696 = vld [vmem:[%s577 + $0x4] sm:$0xf]
        %v697 = vld [vmem:[%s577 + $0x8] sm:$0xf]
        %v698 = vld [vmem:[%s577 + $0xc] sm:$0xf]
        %v699 = vld [vmem:[%s595] sm:$0x1]
        %v700 = vld [vmem:[%s595 + $0x1] sm:$0x1]
        %v701 = vld [vmem:[%s595 + $0x2] sm:$0x1]
        %v702 = vld [vmem:[%s595 + $0x3] sm:$0x1]
        %v707 = vlaneseq
        %v708 = vshrl.u32 %v707, 7
        %v709 = vsub.s32 0, %v708
        %v710 = vrot.slane %v699, %v709
        %v711 = vlaneseq
        %v712 = vshrl.u32 %v711, 7
        %v713 = vsub.s32 0, %v712
        %v714 = vrot.slane %v700, %v713
        %v715 = vlaneseq
        %v716 = vshrl.u32 %v715, 7
        %v717 = vsub.s32 0, %v716
        %v718 = vrot.slane %v701, %v717
        %v719 = vlaneseq
        %v720 = vshrl.u32 %v719, 7
        %v721 = vsub.s32 0, %v720
        %v722 = vrot.slane %v702, %v721
        %vm727 = vcmask 64512
        %v729 = vsel %vm727, %v691, 0
        %v732 = vsel %vm727, %v695, 0
        %734 = vmatprep.subr.bf16.mxu0 0
        %735 = vmatpush1.bf16.xpose.msra.mxu0 %v732
        %736 = vmatprep.subr.bf16.mxu0 0
        %737 = vmatpush1.bf16.xpose.msra.mxu0 0
        %738 = vmatprep.subr.bf16.mxu0 0
        %739 = vmatpush1.bf16.xpose.msra.mxu0 0
        %740 = vmatprep.subr.bf16.mxu0 0
        %741 = vmatpush1.bf16.xpose.msra.mxu0 0
        %742 = vmatprep.subr.bf16.mxu0 0
        %743 = vmatpush1.bf16.xpose.msra.mxu0 0
        %744 = vmatprep.subr.bf16.mxu0 0
        %745 = vmatpush1.bf16.xpose.msra.mxu0 0
        %746 = vmatprep.subr.bf16.mxu0 0
        %747 = vmatpush1.bf16.xpose.msra.mxu0 0
        %748 = vmatprep.subr.bf16.mxu0 0
        %749 = vmatpush1.bf16.xpose.msra.mxu0 0
        %750 = vmatprep.subr.bf16.mxu0 0
        %751 = vmatpush1.bf16.xpose.msra.mxu0 0
        %752 = vmatprep.subr.bf16.mxu0 0
        %753 = vmatpush1.bf16.xpose.msra.mxu0 0
        %754 = vmatprep.subr.bf16.mxu0 0
        %755 = vmatpush1.bf16.xpose.msra.mxu0 0
        %756 = vmatprep.subr.bf16.mxu0 0
        %757 = vmatpush1.bf16.xpose.msra.mxu0 0
        %758 = vmatprep.subr.bf16.mxu0 0
        %759 = vmatpush1.bf16.xpose.msra.mxu0 0
        %760 = vmatprep.subr.bf16.mxu0 0
        %761 = vmatpush1.bf16.xpose.msra.mxu0 0
        %762 = vmatprep.subr.bf16.mxu0 0
        %763 = vmatpush1.bf16.xpose.msra.mxu0 0
        %764 = vmatprep.subr.bf16.mxu0 0
        %765 = vmatpush1.bf16.xpose.msra.mxu0 0
        %766 = vmatprep.mubr.bf16.mxu0 0
        %767 = vmatmul.mubr.bf16.gmra.mrb[0].mxu0 %v729
        %v768 = vpop.f32.mrb[0].mxu0
        %v769 = vadd.f32 %v710, %v768
        %v770 = vpop.f32.mrb[0].mxu0
        %v771 = vpop.f32.mrb[0].mxu0
        %v772 = vpop.f32.mrb[0].mxu0
        %773 = vdwg.mxu0
        %v775 = vsel %vm727, %v692, 0
        %v778 = vsel %vm727, %v696, 0
        %780 = vmatprep.subr.bf16.mxu0 0
        %781 = vmatpush1.bf16.xpose.msra.mxu0 %v778
        %782 = vmatprep.subr.bf16.mxu0 0
        %783 = vmatpush1.bf16.xpose.msra.mxu0 0
        %784 = vmatprep.subr.bf16.mxu0 0
        %785 = vmatpush1.bf16.xpose.msra.mxu0 0
        %786 = vmatprep.subr.bf16.mxu0 0
        %787 = vmatpush1.bf16.xpose.msra.mxu0 0
        %788 = vmatprep.subr.bf16.mxu0 0
        %789 = vmatpush1.bf16.xpose.msra.mxu0 0
        %790 = vmatprep.subr.bf16.mxu0 0
        %791 = vmatpush1.bf16.xpose.msra.mxu0 0
        %792 = vmatprep.subr.bf16.mxu0 0
        %793 = vmatpush1.bf16.xpose.msra.mxu0 0
        %794 = vmatprep.subr.bf16.mxu0 0
        %795 = vmatpush1.bf16.xpose.msra.mxu0 0
        %796 = vmatprep.subr.bf16.mxu0 0
        %797 = vmatpush1.bf16.xpose.msra.mxu0 0
        %798 = vmatprep.subr.bf16.mxu0 0
        %799 = vmatpush1.bf16.xpose.msra.mxu0 0
        %800 = vmatprep.subr.bf16.mxu0 0
        %801 = vmatpush1.bf16.xpose.msra.mxu0 0
        %802 = vmatprep.subr.bf16.mxu0 0
        %803 = vmatpush1.bf16.xpose.msra.mxu0 0
        %804 = vmatprep.subr.bf16.mxu0 0
        %805 = vmatpush1.bf16.xpose.msra.mxu0 0
        %806 = vmatprep.subr.bf16.mxu0 0
        %807 = vmatpush1.bf16.xpose.msra.mxu0 0
        %808 = vmatprep.subr.bf16.mxu0 0
        %809 = vmatpush1.bf16.xpose.msra.mxu0 0
        %810 = vmatprep.subr.bf16.mxu0 0
        %811 = vmatpush1.bf16.xpose.msra.mxu0 0
        %812 = vmatprep.mubr.bf16.mxu0 0
        %813 = vmatmul.mubr.bf16.gmra.mrb[0].mxu0 %v775
        %v814 = vpop.f32.mrb[0].mxu0
        %v815 = vadd.f32 %v714, %v814
        %v816 = vpop.f32.mrb[0].mxu0
        %v817 = vpop.f32.mrb[0].mxu0
        %v818 = vpop.f32.mrb[0].mxu0
        %819 = vdwg.mxu0
        %v821 = vsel %vm727, %v693, 0
        %v824 = vsel %vm727, %v697, 0
        %826 = vmatprep.subr.bf16.mxu0 0
        %827 = vmatpush1.bf16.xpose.msra.mxu0 %v824
        %828 = vmatprep.subr.bf16.mxu0 0
        %829 = vmatpush1.bf16.xpose.msra.mxu0 0
        %830 = vmatprep.subr.bf16.mxu0 0
        %831 = vmatpush1.bf16.xpose.msra.mxu0 0
        %832 = vmatprep.subr.bf16.mxu0 0
        %833 = vmatpush1.bf16.xpose.msra.mxu0 0
        %834 = vmatprep.subr.bf16.mxu0 0
        %835 = vmatpush1.bf16.xpose.msra.mxu0 0
        %836 = vmatprep.subr.bf16.mxu0 0
        %837 = vmatpush1.bf16.xpose.msra.mxu0 0
        %838 = vmatprep.subr.bf16.mxu0 0
        %839 = vmatpush1.bf16.xpose.msra.mxu0 0
        %840 = vmatprep.subr.bf16.mxu0 0
        %841 = vmatpush1.bf16.xpose.msra.mxu0 0
        %842 = vmatprep.subr.bf16.mxu0 0
        %843 = vmatpush1.bf16.xpose.msra.mxu0 0
        %844 = vmatprep.subr.bf16.mxu0 0
        %845 = vmatpush1.bf16.xpose.msra.mxu0 0
        %846 = vmatprep.subr.bf16.mxu0 0
        %847 = vmatpush1.bf16.xpose.msra.mxu0 0
        %848 = vmatprep.subr.bf16.mxu0 0
        %849 = vmatpush1.bf16.xpose.msra.mxu0 0
        %850 = vmatprep.subr.bf16.mxu0 0
        %851 = vmatpush1.bf16.xpose.msra.mxu0 0
        %852 = vmatprep.subr.bf16.mxu0 0
        %853 = vmatpush1.bf16.xpose.msra.mxu0 0
        %854 = vmatprep.subr.bf16.mxu0 0
        %855 = vmatpush1.bf16.xpose.msra.mxu0 0
        %856 = vmatprep.subr.bf16.mxu0 0
        %857 = vmatpush1.bf16.xpose.msra.mxu0 0
        %858 = vmatprep.mubr.bf16.mxu0 0
        %859 = vmatmul.mubr.bf16.gmra.mrb[0].mxu0 %v821
        %v860 = vpop.f32.mrb[0].mxu0
        %v861 = vadd.f32 %v718, %v860
        %v862 = vpop.f32.mrb[0].mxu0
        %v863 = vpop.f32.mrb[0].mxu0
        %v864 = vpop.f32.mrb[0].mxu0
        %865 = vdwg.mxu0
        %v867 = vsel %vm727, %v694, 0
        %v870 = vsel %vm727, %v698, 0
        %872 = vmatprep.subr.bf16.mxu0 0
        %873 = vmatpush1.bf16.xpose.msra.mxu0 %v870
        %874 = vmatprep.subr.bf16.mxu0 0
        %875 = vmatpush1.bf16.xpose.msra.mxu0 0
        %876 = vmatprep.subr.bf16.mxu0 0
        %877 = vmatpush1.bf16.xpose.msra.mxu0 0
        %878 = vmatprep.subr.bf16.mxu0 0
        %879 = vmatpush1.bf16.xpose.msra.mxu0 0
        %880 = vmatprep.subr.bf16.mxu0 0
        %881 = vmatpush1.bf16.xpose.msra.mxu0 0
        %882 = vmatprep.subr.bf16.mxu0 0
        %883 = vmatpush1.bf16.xpose.msra.mxu0 0
        %884 = vmatprep.subr.bf16.mxu0 0
        %885 = vmatpush1.bf16.xpose.msra.mxu0 0
        %886 = vmatprep.subr.bf16.mxu0 0
        %887 = vmatpush1.bf16.xpose.msra.mxu0 0
        %888 = vmatprep.subr.bf16.mxu0 0
        %889 = vmatpush1.bf16.xpose.msra.mxu0 0
        %890 = vmatprep.subr.bf16.mxu0 0
        %891 = vmatpush1.bf16.xpose.msra.mxu0 0
        %892 = vmatprep.subr.bf16.mxu0 0
        %893 = vmatpush1.bf16.xpose.msra.mxu0 0
        %894 = vmatprep.subr.bf16.mxu0 0
        %895 = vmatpush1.bf16.xpose.msra.mxu0 0
        %896 = vmatprep.subr.bf16.mxu0 0
        %897 = vmatpush1.bf16.xpose.msra.mxu0 0
        %898 = vmatprep.subr.bf16.mxu0 0
        %899 = vmatpush1.bf16.xpose.msra.mxu0 0
        %900 = vmatprep.subr.bf16.mxu0 0
        %901 = vmatpush1.bf16.xpose.msra.mxu0 0
        %902 = vmatprep.subr.bf16.mxu0 0
        %903 = vmatpush1.bf16.xpose.msra.mxu0 0
        %904 = vmatprep.mubr.bf16.mxu0 0
        %905 = vmatmul.mubr.bf16.gmra.mrb[0].mxu0 %v867
        %v906 = vpop.f32.mrb[0].mxu0
        %v907 = vadd.f32 %v722, %v906
        %v908 = vpop.f32.mrb[0].mxu0
        %v909 = vpop.f32.mrb[0].mxu0
        %v910 = vpop.f32.mrb[0].mxu0
        %911 = vdwg.mxu0
        %v912 = vsel %vm727, %v769, -inf
        %913 = vmax.xlane.f32.xlu0 %v912
        %v914 = vpop.xlane.xlu0 %913
        %v915 = vsel %vm727, %v815, -inf
        %916 = vmax.xlane.f32.xlu0 %v915
        %v917 = vpop.xlane.xlu0 %916
        %v918 = vsel %vm727, %v861, -inf
        %919 = vmax.xlane.f32.xlu0 %v918
        %v920 = vpop.xlane.xlu0 %919
        %v921 = vsel %vm727, %v907, -inf
        %922 = vmax.xlane.f32.xlu0 %v921
        %v923 = vpop.xlane.xlu0 %922
        %v924 = vsub.f32 %v769, %v914
        %v925 = vsub.f32 %v815, %v917
        %v926 = vsub.f32 %v861, %v920
        %v927 = vsub.f32 %v907, %v923
        %v928 = vmul.f32 %v924, 1.442695
        %v929 = vpow.pop %v928
        %v930 = vmul.f32 %v925, 1.442695
        %v931 = vpow.pop %v930
        %v932 = vmul.f32 %v926, 1.442695
        %v933 = vpow.pop %v932
        %v934 = vmul.f32 %v927, 1.442695
        %v935 = vpow.pop %v934
        %v936 = vsel %vm727, %v929, 0.0
        %937 = vadd.xlane.f32.xlu0 %v936
        %v938 = vpop.xlane.xlu0 %937
        %v939 = vsel %vm727, %v931, 0.0
        %940 = vadd.xlane.f32.xlu0 %v939
        %v941 = vpop.xlane.xlu0 %940
        %v942 = vsel %vm727, %v933, 0.0
        %943 = vadd.xlane.f32.xlu0 %v942
        %v944 = vpop.xlane.xlu0 %943
        %v945 = vsel %vm727, %v935, 0.0
        %946 = vadd.xlane.f32.xlu0 %v945
        %v947 = vpop.xlane.xlu0 %946
        %v948 = vrcp.pop %v938
        %v949 = vrcp.pop %v941
        %v950 = vrcp.pop %v944
        %v951 = vrcp.pop %v947
        %v952 = vmul.f32 %v929, %v948
        %v953 = vmul.f32 %v931, %v949
        %v954 = vmul.f32 %v933, %v950
        %v955 = vmul.f32 %v935, %v951
        %v956 = vpack.c.bf16 %v952, %v952
        %v957 = vpack.c.bf16 %v953, %v953
        %v958 = vpack.c.bf16 %v954, %v954
        %v959 = vpack.c.bf16 %v955, %v955
        %v960 = vld [vmem:[%s586] sm:$0xf]
        %v961 = vld [vmem:[%s586 + $0x4] sm:$0xf]
        %v962 = vld [vmem:[%s586 + $0x8] sm:$0xf]
        %v963 = vld [vmem:[%s586 + $0xc] sm:$0xf]
        %v965 = vsel %vm727, %v956, 0
        %vm967 = vcmask 1043456
        %v969 = vsel %vm967, %v960, 0
        %971 = vmatprep.subr.bf16.mxu0 0
        %972 = vmatpush1.bf16.msra.mxu0 %v969
        %973 = vmatprep.subr.bf16.mxu0 0
        %974 = vmatpush1.bf16.msra.mxu0 0
        %975 = vmatprep.subr.bf16.mxu0 0
        %976 = vmatpush1.bf16.msra.mxu0 0
        %977 = vmatprep.subr.bf16.mxu0 0
        %978 = vmatpush1.bf16.msra.mxu0 0
        %979 = vmatprep.subr.bf16.mxu0 0
        %980 = vmatpush1.bf16.msra.mxu0 0
        %981 = vmatprep.subr.bf16.mxu0 0
        %982 = vmatpush1.bf16.msra.mxu0 0
        %983 = vmatprep.subr.bf16.mxu0 0
        %984 = vmatpush1.bf16.msra.mxu0 0
        %985 = vmatprep.subr.bf16.mxu0 0
        %986 = vmatpush1.bf16.msra.mxu0 0
        %987 = vmatprep.subr.bf16.mxu0 0
        %988 = vmatpush1.bf16.msra.mxu0 0
        %989 = vmatprep.subr.bf16.mxu0 0
        %990 = vmatpush1.bf16.msra.mxu0 0
        %991 = vmatprep.subr.bf16.mxu0 0
        %992 = vmatpush1.bf16.msra.mxu0 0
        %993 = vmatprep.subr.bf16.mxu0 0
        %994 = vmatpush1.bf16.msra.mxu0 0
        %995 = vmatprep.subr.bf16.mxu0 0
        %996 = vmatpush1.bf16.msra.mxu0 0
        %997 = vmatprep.subr.bf16.mxu0 0
        %998 = vmatpush1.bf16.msra.mxu0 0
        %999 = vmatprep.subr.bf16.mxu0 0
        %1000 = vmatpush1.bf16.msra.mxu0 0
        %1001 = vmatprep.subr.bf16.mxu0 0
        %1002 = vmatpush1.bf16.msra.mxu0 0
        %1003 = vmatprep.mubr.bf16.mxu0 0
        %1004 = vmatmul.mubr.bf16.gmra.mrb[0].mxu0 %v965
        %v1005 = vpop.f32.mrb[0].mxu0
        %v1006 = vadd.f32 0.0, %v1005
        %v1007 = vpop.f32.mrb[0].mxu0
        %v1008 = vpop.f32.mrb[0].mxu0
        %v1009 = vpop.f32.mrb[0].mxu0
        %1010 = vdwg.mxu0
        %v1012 = vsel %vm727, %v957, 0
        %v1015 = vsel %vm967, %v961, 0
        %1017 = vmatprep.subr.bf16.mxu0 0
        %1018 = vmatpush1.bf16.msra.mxu0 %v1015
        %1019 = vmatprep.subr.bf16.mxu0 0
        %1020 = vmatpush1.bf16.msra.mxu0 0
        %1021 = vmatprep.subr.bf16.mxu0 0
        %1022 = vmatpush1.bf16.msra.mxu0 0
        %1023 = vmatprep.subr.bf16.mxu0 0
        %1024 = vmatpush1.bf16.msra.mxu0 0
        %1025 = vmatprep.subr.bf16.mxu0 0
        %1026 = vmatpush1.bf16.msra.mxu0 0
        %1027 = vmatprep.subr.bf16.mxu0 0
        %1028 = vmatpush1.bf16.msra.mxu0 0
        %1029 = vmatprep.subr.bf16.mxu0 0
        %1030 = vmatpush1.bf16.msra.mxu0 0
        %1031 = vmatprep.subr.bf16.mxu0 0
        %1032 = vmatpush1.bf16.msra.mxu0 0
        %1033 = vmatprep.subr.bf16.mxu0 0
        %1034 = vmatpush1.bf16.msra.mxu0 0
        %1035 = vmatprep.subr.bf16.mxu0 0
        %1036 = vmatpush1.bf16.msra.mxu0 0
        %1037 = vmatprep.subr.bf16.mxu0 0
        %1038 = vmatpush1.bf16.msra.mxu0 0
        %1039 = vmatprep.subr.bf16.mxu0 0
        %1040 = vmatpush1.bf16.msra.mxu0 0
        %1041 = vmatprep.subr.bf16.mxu0 0
        %1042 = vmatpush1.bf16.msra.mxu0 0
        %1043 = vmatprep.subr.bf16.mxu0 0
        %1044 = vmatpush1.bf16.msra.mxu0 0
        %1045 = vmatprep.subr.bf16.mxu0 0
        %1046 = vmatpush1.bf16.msra.mxu0 0
        %1047 = vmatprep.subr.bf16.mxu0 0
        %1048 = vmatpush1.bf16.msra.mxu0 0
        %1049 = vmatprep.mubr.bf16.mxu0 0
        %1050 = vmatmul.mubr.bf16.gmra.mrb[0].mxu0 %v1012
        %v1051 = vpop.f32.mrb[0].mxu0
        %v1052 = vadd.f32 0.0, %v1051
        %v1053 = vpop.f32.mrb[0].mxu0
        %v1054 = vpop.f32.mrb[0].mxu0
        %v1055 = vpop.f32.mrb[0].mxu0
        %1056 = vdwg.mxu0
        %v1058 = vsel %vm727, %v958, 0
        %v1061 = vsel %vm967, %v962, 0
        %1063 = vmatprep.subr.bf16.mxu0 0
        %1064 = vmatpush1.bf16.msra.mxu0 %v1061
        %1065 = vmatprep.subr.bf16.mxu0 0
        %1066 = vmatpush1.bf16.msra.mxu0 0
        %1067 = vmatprep.subr.bf16.mxu0 0
        %1068 = vmatpush1.bf16.msra.mxu0 0
        %1069 = vmatprep.subr.bf16.mxu0 0
        %1070 = vmatpush1.bf16.msra.mxu0 0
        %1071 = vmatprep.subr.bf16.mxu0 0
        %1072 = vmatpush1.bf16.msra.mxu0 0
        %1073 = vmatprep.subr.bf16.mxu0 0
        %1074 = vmatpush1.bf16.msra.mxu0 0
        %1075 = vmatprep.subr.bf16.mxu0 0
        %1076 = vmatpush1.bf16.msra.mxu0 0
        %1077 = vmatprep.subr.bf16.mxu0 0
        %1078 = vmatpush1.bf16.msra.mxu0 0
        %1079 = vmatprep.subr.bf16.mxu0 0
        %1080 = vmatpush1.bf16.msra.mxu0 0
        %1081 = vmatprep.subr.bf16.mxu0 0
        %1082 = vmatpush1.bf16.msra.mxu0 0
        %1083 = vmatprep.subr.bf16.mxu0 0
        %1084 = vmatpush1.bf16.msra.mxu0 0
        %1085 = vmatprep.subr.bf16.mxu0 0
        %1086 = vmatpush1.bf16.msra.mxu0 0
        %1087 = vmatprep.subr.bf16.mxu0 0
        %1088 = vmatpush1.bf16.msra.mxu0 0
        %1089 = vmatprep.subr.bf16.mxu0 0
        %1090 = vmatpush1.bf16.msra.mxu0 0
        %1091 = vmatprep.subr.bf16.mxu0 0
        %1092 = vmatpush1.bf16.msra.mxu0 0
        %1093 = vmatprep.subr.bf16.mxu0 0
        %1094 = vmatpush1.bf16.msra.mxu0 0
        %1095 = vmatprep.mubr.bf16.mxu0 0
        %1096 = vmatmul.mubr.bf16.gmra.mrb[0].mxu0 %v1058
        %v1097 = vpop.f32.mrb[0].mxu0
        %v1098 = vadd.f32 0.0, %v1097
        %v1099 = vpop.f32.mrb[0].mxu0
        %v1100 = vpop.f32.mrb[0].mxu0
        %v1101 = vpop.f32.mrb[0].mxu0
        %1102 = vdwg.mxu0
        %v1104 = vsel %vm727, %v959, 0
        %v1107 = vsel %vm967, %v963, 0
        %1109 = vmatprep.subr.bf16.mxu0 0
        %1110 = vmatpush1.bf16.msra.mxu0 %v1107
        %1111 = vmatprep.subr.bf16.mxu0 0
        %1112 = vmatpush1.bf16.msra.mxu0 0
        %1113 = vmatprep.subr.bf16.mxu0 0
        %1114 = vmatpush1.bf16.msra.mxu0 0
        %1115 = vmatprep.subr.bf16.mxu0 0
        %1116 = vmatpush1.bf16.msra.mxu0 0
        %1117 = vmatprep.subr.bf16.mxu0 0
        %1118 = vmatpush1.bf16.msra.mxu0 0
        %1119 = vmatprep.subr.bf16.mxu0 0
        %1120 = vmatpush1.bf16.msra.mxu0 0
        %1121 = vmatprep.subr.bf16.mxu0 0
        %1122 = vmatpush1.bf16.msra.mxu0 0
        %1123 = vmatprep.subr.bf16.mxu0 0
        %1124 = vmatpush1.bf16.msra.mxu0 0
        %1125 = vmatprep.subr.bf16.mxu0 0
        %1126 = vmatpush1.bf16.msra.mxu0 0
        %1127 = vmatprep.subr.bf16.mxu0 0
        %1128 = vmatpush1.bf16.msra.mxu0 0
        %1129 = vmatprep.subr.bf16.mxu0 0
        %1130 = vmatpush1.bf16.msra.mxu0 0
        %1131 = vmatprep.subr.bf16.mxu0 0
        %1132 = vmatpush1.bf16.msra.mxu0 0
        %1133 = vmatprep.subr.bf16.mxu0 0
        %1134 = vmatpush1.bf16.msra.mxu0 0
        %1135 = vmatprep.subr.bf16.mxu0 0
        %1136 = vmatpush1.bf16.msra.mxu0 0
        %1137 = vmatprep.subr.bf16.mxu0 0
        %1138 = vmatpush1.bf16.msra.mxu0 0
        %1139 = vmatprep.subr.bf16.mxu0 0
        %1140 = vmatpush1.bf16.msra.mxu0 0
        %1141 = vmatprep.mubr.bf16.mxu0 0
        %1142 = vmatmul.mubr.bf16.gmra.mrb[0].mxu0 %v1104
        %v1143 = vpop.f32.mrb[0].mxu0
        %v1144 = vadd.f32 0.0, %v1143
        %v1145 = vpop.f32.mrb[0].mxu0
        %v1146 = vpop.f32.mrb[0].mxu0
        %v1147 = vpop.f32.mrb[0].mxu0
        %1148 = vdwg.mxu0
        %v1149 = vpack.c.bf16 %v1006, %v1006
        %v1150 = vpack.c.bf16 %v1052, %v1052
        %v1151 = vpack.c.bf16 %v1098, %v1098
        %v1152 = vpack.c.bf16 %v1144, %v1144
        %v1153 = vld [vmem:[%s689] sm:$0xff]
        %v1154 = vld [vmem:[%s6] sm:$0x1]
        %v1156 = vlaneseq
        %v1157 = vshrl.u32 %v1156, 7
        %v1158 = vsub.s32 0, %v1157
        %v1159 = vrot.slane %v1154, %v1158
        %v1161 = vadd.f32 %v1153, %v1159
        %v1162 = vld [vmem:[#allocation8] sm:$0xf]
        %v1164 = vsel %vm727, %v1149, 0
        %v1167 = vsel %vm967, %v1162, 0
        %1169 = vmatprep.subr.bf16.mxu0 0
        %1170 = vmatpush1.bf16.msra.mxu0 %v1167
        %1171 = vmatprep.subr.bf16.mxu0 0
        %1172 = vmatpush1.bf16.msra.mxu0 0
        %1173 = vmatprep.subr.bf16.mxu0 0
        %1174 = vmatpush1.bf16.msra.mxu0 0
        %1175 = vmatprep.subr.bf16.mxu0 0
        %1176 = vmatpush1.bf16.msra.mxu0 0
        %1177 = vmatprep.subr.bf16.mxu0 0
        %1178 = vmatpush1.bf16.msra.mxu0 0
        %1179 = vmatprep.subr.bf16.mxu0 0
        %1180 = vmatpush1.bf16.msra.mxu0 0
        %1181 = vmatprep.subr.bf16.mxu0 0
        %1182 = vmatpush1.bf16.msra.mxu0 0
        %1183 = vmatprep.subr.bf16.mxu0 0
        %1184 = vmatpush1.bf16.msra.mxu0 0
        %1185 = vmatprep.subr.bf16.mxu0 0
        %1186 = vmatpush1.bf16.msra.mxu0 0
        %1187 = vmatprep.subr.bf16.mxu0 0
        %1188 = vmatpush1.bf16.msra.mxu0 0
        %1189 = vmatprep.subr.bf16.mxu0 0
        %1190 = vmatpush1.bf16.msra.mxu0 0
        %1191 = vmatprep.subr.bf16.mxu0 0
        %1192 = vmatpush1.bf16.msra.mxu0 0
        %1193 = vmatprep.subr.bf16.mxu0 0
        %1194 = vmatpush1.bf16.msra.mxu0 0
        %1195 = vmatprep.subr.bf16.mxu0 0
        %1196 = vmatpush1.bf16.msra.mxu0 0
        %1197 = vmatprep.subr.bf16.mxu0 0
        %1198 = vmatpush1.bf16.msra.mxu0 0
        %1199 = vmatprep.subr.bf16.mxu0 0
        %1200 = vmatpush1.bf16.msra.mxu0 0
        %1201 = vmatprep.mubr.bf16.mxu0 0
        %1202 = vmatmul.mubr.bf16.gmra.mrb[0].mxu0 %v1164
        %v1203 = vpop.f32.mrb[0].mxu0
        %v1204 = vadd.f32 0.0, %v1203
        %v1205 = vpop.f32.mrb[0].mxu0
        %v1206 = vpop.f32.mrb[0].mxu0
        %v1207 = vpop.f32.mrb[0].mxu0
        %1208 = vdwg.mxu0
        %v1209 = vadd.f32 %v1161, %v1204
        %s1210 = scalar_lea.vmem [#allocation8], 4
        %v1211 = vld [vmem:[%s1210] sm:$0xf]
        %v1213 = vsel %vm727, %v1150, 0
        %v1216 = vsel %vm967, %v1211, 0
        %1218 = vmatprep.subr.bf16.mxu0 0
        %1219 = vmatpush1.bf16.msra.mxu0 %v1216
        %1220 = vmatprep.subr.bf16.mxu0 0
        %1221 = vmatpush1.bf16.msra.mxu0 0
        %1222 = vmatprep.subr.bf16.mxu0 0
        %1223 = vmatpush1.bf16.msra.mxu0 0
        %1224 = vmatprep.subr.bf16.mxu0 0
        %1225 = vmatpush1.bf16.msra.mxu0 0
        %1226 = vmatprep.subr.bf16.mxu0 0
        %1227 = vmatpush1.bf16.msra.mxu0 0
        %1228 = vmatprep.subr.bf16.mxu0 0
        %1229 = vmatpush1.bf16.msra.mxu0 0
        %1230 = vmatprep.subr.bf16.mxu0 0
        %1231 = vmatpush1.bf16.msra.mxu0 0
        %1232 = vmatprep.subr.bf16.mxu0 0
        %1233 = vmatpush1.bf16.msra.mxu0 0
        %1234 = vmatprep.subr.bf16.mxu0 0
        %1235 = vmatpush1.bf16.msra.mxu0 0
        %1236 = vmatprep.subr.bf16.mxu0 0
        %1237 = vmatpush1.bf16.msra.mxu0 0
        %1238 = vmatprep.subr.bf16.mxu0 0
        %1239 = vmatpush1.bf16.msra.mxu0 0
        %1240 = vmatprep.subr.bf16.mxu0 0
        %1241 = vmatpush1.bf16.msra.mxu0 0
        %1242 = vmatprep.subr.bf16.mxu0 0
        %1243 = vmatpush1.bf16.msra.mxu0 0
        %1244 = vmatprep.subr.bf16.mxu0 0
        %1245 = vmatpush1.bf16.msra.mxu0 0
        %1246 = vmatprep.subr.bf16.mxu0 0
        %1247 = vmatpush1.bf16.msra.mxu0 0
        %1248 = vmatprep.subr.bf16.mxu0 0
        %1249 = vmatpush1.bf16.msra.mxu0 0
        %1250 = vmatprep.mubr.bf16.mxu0 0
        %1251 = vmatmul.mubr.bf16.gmra.mrb[0].mxu0 %v1213
        %v1252 = vpop.f32.mrb[0].mxu0
        %v1253 = vadd.f32 0.0, %v1252
        %v1254 = vpop.f32.mrb[0].mxu0
        %v1255 = vpop.f32.mrb[0].mxu0
        %v1256 = vpop.f32.mrb[0].mxu0
        %1257 = vdwg.mxu0
        %v1258 = vadd.f32 %v1209, %v1253
        %s1259 = scalar_lea.vmem [#allocation8], 8
        %v1260 = vld [vmem:[%s1259] sm:$0xf]
        %v1262 = vsel %vm727, %v1151, 0
        %v1265 = vsel %vm967, %v1260, 0
        %1267 = vmatprep.subr.bf16.mxu0 0
        %1268 = vmatpush1.bf16.msra.mxu0 %v1265
        %1269 = vmatprep.subr.bf16.mxu0 0
        %1270 = vmatpush1.bf16.msra.mxu0 0
        %1271 = vmatprep.subr.bf16.mxu0 0
        %1272 = vmatpush1.bf16.msra.mxu0 0
        %1273 = vmatprep.subr.bf16.mxu0 0
        %1274 = vmatpush1.bf16.msra.mxu0 0
        %1275 = vmatprep.subr.bf16.mxu0 0
        %1276 = vmatpush1.bf16.msra.mxu0 0
        %1277 = vmatprep.subr.bf16.mxu0 0
        %1278 = vmatpush1.bf16.msra.mxu0 0
        %1279 = vmatprep.subr.bf16.mxu0 0
        %1280 = vmatpush1.bf16.msra.mxu0 0
        %1281 = vmatprep.subr.bf16.mxu0 0
        %1282 = vmatpush1.bf16.msra.mxu0 0
        %1283 = vmatprep.subr.bf16.mxu0 0
        %1284 = vmatpush1.bf16.msra.mxu0 0
        %1285 = vmatprep.subr.bf16.mxu0 0
        %1286 = vmatpush1.bf16.msra.mxu0 0
        %1287 = vmatprep.subr.bf16.mxu0 0
        %1288 = vmatpush1.bf16.msra.mxu0 0
        %1289 = vmatprep.subr.bf16.mxu0 0
        %1290 = vmatpush1.bf16.msra.mxu0 0
        %1291 = vmatprep.subr.bf16.mxu0 0
        %1292 = vmatpush1.bf16.msra.mxu0 0
        %1293 = vmatprep.subr.bf16.mxu0 0
        %1294 = vmatpush1.bf16.msra.mxu0 0
        %1295 = vmatprep.subr.bf16.mxu0 0
        %1296 = vmatpush1.bf16.msra.mxu0 0
        %1297 = vmatprep.subr.bf16.mxu0 0
        %1298 = vmatpush1.bf16.msra.mxu0 0
        %1299 = vmatprep.mubr.bf16.mxu0 0
        %1300 = vmatmul.mubr.bf16.gmra.mrb[0].mxu0 %v1262
        %v1301 = vpop.f32.mrb[0].mxu0
        %v1302 = vadd.f32 0.0, %v1301
        %v1303 = vpop.f32.mrb[0].mxu0
        %v1304 = vpop.f32.mrb[0].mxu0
        %v1305 = vpop.f32.mrb[0].mxu0
        %1306 = vdwg.mxu0
        %v1307 = vadd.f32 %v1258, %v1302
        %s1308 = scalar_lea.vmem [#allocation8], 12
        %v1309 = vld [vmem:[%s1308] sm:$0xf]
        %v1311 = vsel %vm727, %v1152, 0
        %v1314 = vsel %vm967, %v1309, 0
        %1316 = vmatprep.subr.bf16.mxu0 0
        %1317 = vmatpush1.bf16.msra.mxu0 %v1314
        %1318 = vmatprep.subr.bf16.mxu0 0
        %1319 = vmatpush1.bf16.msra.mxu0 0
        %1320 = vmatprep.subr.bf16.mxu0 0
        %1321 = vmatpush1.bf16.msra.mxu0 0
        %1322 = vmatprep.subr.bf16.mxu0 0
        %1323 = vmatpush1.bf16.msra.mxu0 0
        %1324 = vmatprep.subr.bf16.mxu0 0
        %1325 = vmatpush1.bf16.msra.mxu0 0
        %1326 = vmatprep.subr.bf16.mxu0 0
        %1327 = vmatpush1.bf16.msra.mxu0 0
        %1328 = vmatprep.subr.bf16.mxu0 0
        %1329 = vmatpush1.bf16.msra.mxu0 0
        %1330 = vmatprep.subr.bf16.mxu0 0
        %1331 = vmatpush1.bf16.msra.mxu0 0
        %1332 = vmatprep.subr.bf16.mxu0 0
        %1333 = vmatpush1.bf16.msra.mxu0 0
        %1334 = vmatprep.subr.bf16.mxu0 0
        %1335 = vmatpush1.bf16.msra.mxu0 0
        %1336 = vmatprep.subr.bf16.mxu0 0
        %1337 = vmatpush1.bf16.msra.mxu0 0
        %1338 = vmatprep.subr.bf16.mxu0 0
        %1339 = vmatpush1.bf16.msra.mxu0 0
        %1340 = vmatprep.subr.bf16.mxu0 0
        %1341 = vmatpush1.bf16.msra.mxu0 0
        %1342 = vmatprep.subr.bf16.mxu0 0
        %1343 = vmatpush1.bf16.msra.mxu0 0
        %1344 = vmatprep.subr.bf16.mxu0 0
        %1345 = vmatpush1.bf16.msra.mxu0 0
        %1346 = vmatprep.subr.bf16.mxu0 0
        %1347 = vmatpush1.bf16.msra.mxu0 0
        %1348 = vmatprep.mubr.bf16.mxu0 0
        %1349 = vmatmul.mubr.bf16.gmra.mrb[0].mxu0 %v1311
        %v1350 = vpop.f32.mrb[0].mxu0
        %v1351 = vadd.f32 0.0, %v1350
        %v1352 = vpop.f32.mrb[0].mxu0
        %v1353 = vpop.f32.mrb[0].mxu0
        %v1354 = vpop.f32.mrb[0].mxu0
        %1355 = vdwg.mxu0
        %v1356 = vadd.f32 %v1307, %v1351
        %v1357 = vld [vmem:[%s7] sm:$0x1]
        %v1358 = vld [vmem:[#allocation10] sm:$0x1]
        %vm1359 = vcmask 261120
        %v1360 = vsel %vm1359, %v1356, 0.0
        %1361 = vadd.xlane.f32.xlu0 %v1360
        %v1362 = vpop.xlane.xlu0 %1361
        %v1363 = vrcp.pop 32.0
        %v1364 = vmul.f32 %v1362, %v1363
        %v1365 = vsub.f32 %v1356, %v1364
        %v1366 = vmul.f32 %v1365, %v1365
        %v1367 = vsel %vm1359, %v1366, 0.0
        %1368 = vadd.xlane.f32.xlu0 %v1367
        %v1369 = vpop.xlane.xlu0 %1368
        %v1370 = vmul.f32 %v1369, %v1363
        %v1371 = vadd.f32 %v1370, 1e-12
        %v1372 = vrsqrt.pop %v1371
        %v1373 = vmul.f32 %v1365, %v1372
        %v1375 = vlaneseq
        %v1376 = vshrl.u32 %v1375, 7
        %v1377 = vsub.s32 0, %v1376
        %v1378 = vrot.slane %v1357, %v1377
        %v1380 = vmul.f32 %v1373, %v1378
        %v1382 = vlaneseq
        %v1383 = vshrl.u32 %v1382, 7
        %v1384 = vsub.s32 0, %v1383
        %v1385 = vrot.slane %v1358, %v1384
        %v1387 = vadd.f32 %v1380, %v1385
        %v1388 = vpack.c.bf16 %v1387, %v1387
        %v1389 = vld [vmem:[%s9] sm:$0xf]
        %v1390 = vld [vmem:[%s9 + $0x4] sm:$0xf]
        %v1391 = vld [vmem:[%s9 + $0x8] sm:$0xf]
        %v1392 = vld [vmem:[%s9 + $0xc] sm:$0xf]
        %v1393 = vld [vmem:[%s10] sm:$0x1]
        %v1395 = vlaneseq
        %v1396 = vshrl.u32 %v1395, 7
        %v1397 = vsub.s32 0, %v1396
        %v1398 = vrot.slane %v1393, %v1397
        %v1404 = vunpack.c.l.b16 %v1389
        %v1405 = vunpack.c.l.b16 %v1390
        %v1406 = vunpack.c.l.b16 %v1391
        %v1407 = vunpack.c.l.b16 %v1392
        %v1408 = vpack.c.b16 %v1405, %v1404
        %v1409 = vpack.c.b16 %v1407, %v1406
        %v1413 = vsel %vm1359, %v1388, 0
        %1415 = vmatprep.subr.bf16.mxu0 0
        %1416 = vmatpush1.bf16.msra.mxu0 %v1408
        %1417 = vmatprep.subr.bf16.mxu0 0
        %1418 = vmatpush1.bf16.msra.mxu0 %v1409
        %1419 = vmatprep.subr.bf16.mxu0 0
        %1420 = vmatpush1.bf16.msra.mxu0 0
        %1421 = vmatprep.subr.bf16.mxu0 0
        %1422 = vmatpush1.bf16.msra.mxu0 0
        %1423 = vmatprep.subr.bf16.mxu0 0
        %1424 = vmatpush1.bf16.msra.mxu0 0
        %1425 = vmatprep.subr.bf16.mxu0 0
        %1426 = vmatpush1.bf16.msra.mxu0 0
        %1427 = vmatprep.subr.bf16.mxu0 0
        %1428 = vmatpush1.bf16.msra.mxu0 0
        %1429 = vmatprep.subr.bf16.mxu0 0
        %1430 = vmatpush1.bf16.msra.mxu0 0
        %1431 = vmatprep.subr.bf16.mxu0 0
        %1432 = vmatpush1.bf16.msra.mxu0 0
        %1433 = vmatprep.subr.bf16.mxu0 0
        %1434 = vmatpush1.bf16.msra.mxu0 0
        %1435 = vmatprep.subr.bf16.mxu0 0
        %1436 = vmatpush1.bf16.msra.mxu0 0
        %1437 = vmatprep.subr.bf16.mxu0 0
        %1438 = vmatpush1.bf16.msra.mxu0 0
        %1439 = vmatprep.subr.bf16.mxu0 0
        %1440 = vmatpush1.bf16.msra.mxu0 0
        %1441 = vmatprep.subr.bf16.mxu0 0
        %1442 = vmatpush1.bf16.msra.mxu0 0
        %1443 = vmatprep.subr.bf16.mxu0 0
        %1444 = vmatpush1.bf16.msra.mxu0 0
        %1445 = vmatprep.subr.bf16.mxu0 0
        %1446 = vmatpush1.bf16.msra.mxu0 0
        %1447 = vmatprep.mubr.bf16.mxu0 0
        %1448 = vmatmul.mubr.bf16.gmra.mrb[0].mxu0 %v1413
        %v1449 = vpop.f32.mrb[0].mxu0
        %v1450 = vadd.f32 %v1398, %v1449
        %v1451 = vpop.f32.mrb[0].mxu0
        %v1452 = vpop.f32.mrb[0].mxu0
        %v1453 = vpop.f32.mrb[0].mxu0
        %1454 = vdwg.mxu0
        %v1455 = vmul.f32 %v1450, %v1450
        %v1456 = vmul.f32 %v1450, %v1455
        %v1457 = vmul.f32 %v1456, 0.044715
        %v1458 = vadd.f32 %v1450, %v1457
        %v1459 = vmul.f32 %v1458, 0.7978846
        %v1460 = vtanh.pop %v1459
        %v1461 = vadd.f32 %v1460, 1.0
        %v1462 = vmul.f32 %v1461, 0.5
        %v1463 = vmul.f32 %v1450, %v1462
        %v1464 = vpack.c.bf16 %v1463, %v1463
        %v1465 = vld [vmem:[%s11] sm:$0xf]
        %v1466 = vld [vmem:[%s11 + $0x4] sm:$0xf]
        %v1467 = vld [vmem:[%s11 + $0x8] sm:$0xf]
        %v1468 = vld [vmem:[%s11 + $0xc] sm:$0xf]
        %v1469 = vld [vmem:[%s11 + $0x10] sm:$0xf]
        %v1470 = vld [vmem:[%s11 + $0x14] sm:$0xf]
        %v1471 = vld [vmem:[%s11 + $0x18] sm:$0xf]
        %v1472 = vld [vmem:[%s11 + $0x1c] sm:$0xf]
        %v1473 = vld [vmem:[%s12] sm:$0x1]
        %v1475 = vlaneseq
        %v1476 = vshrl.u32 %v1475, 7
        %v1477 = vsub.s32 0, %v1476
        %v1478 = vrot.slane %v1473, %v1477
        %v1488 = vunpack.c.l.b16 %v1465
        %v1489 = vunpack.c.l.b16 %v1466
        %v1490 = vunpack.c.l.b16 %v1467
        %v1491 = vunpack.c.l.b16 %v1468
        %v1492 = vunpack.c.l.b16 %v1469
        %v1493 = vunpack.c.l.b16 %v1470
        %v1494 = vunpack.c.l.b16 %v1471
        %v1495 = vunpack.c.l.b16 %v1472
        %v1496 = vpack.c.b16 %v1489, %v1488
        %v1497 = vpack.c.b16 %v1491, %v1490
        %v1498 = vpack.c.b16 %v1493, %v1492
        %v1499 = vpack.c.b16 %v1495, %v1494
        %vm1504 = vcmask 523264
        %v1506 = vsel %vm1504, %v1464, 0
        %1508 = vmatprep.subr.bf16.mxu0 0
        %1509 = vmatpush1.bf16.msra.mxu0 %v1496
        %1510 = vmatprep.subr.bf16.mxu0 0
        %1511 = vmatpush1.bf16.msra.mxu0 %v1497
        %1512 = vmatprep.subr.bf16.mxu0 0
        %1513 = vmatpush1.bf16.msra.mxu0 %v1498
        %1514 = vmatprep.subr.bf16.mxu0 0
        %1515 = vmatpush1.bf16.msra.mxu0 %v1499
        %1516 = vmatprep.subr.bf16.mxu0 0
        %1517 = vmatpush1.bf16.msra.mxu0 0
        %1518 = vmatprep.subr.bf16.mxu0 0
        %1519 = vmatpush1.bf16.msra.mxu0 0
        %1520 = vmatprep.subr.bf16.mxu0 0
        %1521 = vmatpush1.bf16.msra.mxu0 0
        %1522 = vmatprep.subr.bf16.mxu0 0
        %1523 = vmatpush1.bf16.msra.mxu0 0
        %1524 = vmatprep.subr.bf16.mxu0 0
        %1525 = vmatpush1.bf16.msra.mxu0 0
        %1526 = vmatprep.subr.bf16.mxu0 0
        %1527 = vmatpush1.bf16.msra.mxu0 0
        %1528 = vmatprep.subr.bf16.mxu0 0
        %1529 = vmatpush1.bf16.msra.mxu0 0
        %1530 = vmatprep.subr.bf16.mxu0 0
        %1531 = vmatpush1.bf16.msra.mxu0 0
        %1532 = vmatprep.subr.bf16.mxu0 0
        %1533 = vmatpush1.bf16.msra.mxu0 0
        %1534 = vmatprep.subr.bf16.mxu0 0
        %1535 = vmatpush1.bf16.msra.mxu0 0
        %1536 = vmatprep.subr.bf16.mxu0 0
        %1537 = vmatpush1.bf16.msra.mxu0 0
        %1538 = vmatprep.subr.bf16.mxu0 0
        %1539 = vmatpush1.bf16.msra.mxu0 0
        %1540 = vmatprep.mubr.bf16.mxu0 0
        %1541 = vmatmul.mubr.bf16.gmra.mrb[0].mxu0 %v1506
        %v1542 = vpop.f32.mrb[0].mxu0
        %v1543 = vadd.f32 %v1478, %v1542
        %v1544 = vpop.f32.mrb[0].mxu0
        %v1545 = vpop.f32.mrb[0].mxu0
        %v1546 = vpop.f32.mrb[0].mxu0
        %1547 = vdwg.mxu0
        %v1548 = vadd.f32 %v1543, %v1387
        %v1549 = vld [vmem:[%s13] sm:$0x1]
        %v1550 = vld [vmem:[%s14] sm:$0x1]
        %v1551 = vsel %vm1359, %v1548, 0.0
        %1552 = vadd.xlane.f32.xlu0 %v1551
        %v1553 = vpop.xlane.xlu0 %1552
        %v1554 = vmul.f32 %v1553, %v1363
        %v1555 = vsub.f32 %v1548, %v1554
        %v1556 = vmul.f32 %v1555, %v1555
        %v1557 = vsel %vm1359, %v1556, 0.0
        %1558 = vadd.xlane.f32.xlu0 %v1557
        %v1559 = vpop.xlane.xlu0 %1558
        %v1560 = vmul.f32 %v1559, %v1363
        %v1561 = vadd.f32 %v1560, 1e-12
        %v1562 = vrsqrt.pop %v1561
        %v1563 = vmul.f32 %v1555, %v1562
        %v1565 = vlaneseq
        %v1566 = vshrl.u32 %v1565, 7
        %v1567 = vsub.s32 0, %v1566
        %v1568 = vrot.slane %v1549, %v1567
        %v1570 = vmul.f32 %v1563, %v1568
        %v1572 = vlaneseq
        %v1573 = vshrl.u32 %v1572, 7
        %v1574 = vsub.s32 0, %v1573
        %v1575 = vrot.slane %v1550, %v1574
        %v1577 = vadd.f32 %v1570, %v1575
        %1578 = vst.msk [vmem:[%s674] sm:$0xff] %vm1359, %v1577
        %s1579 = sand.u32 %s402, 1
        %s1580 = scalar_lea.sflag [#allocation4], %s1579
        %s1581 = sand.u32 %s402, 1
        %s1582 = smul.addr %s1581, 8
        %s1583 = scalar_lea.vmem [#allocation11], %s1582
        // Predicated region
        $region101: #{tpu_custom_call.1} parent=79 // pred_check
          %p1584 = pneg %p412
        $region102: #{tpu_custom_call.1} parent=79 // pred_check_branch
          %1586 = sbr.rel (%p1584) target = $region104
        $region103: #{tpu_custom_call.1} parent=79 // pred_region
          %s1588 = ssub.s32 128, 128
          %1589 = vsyncadd %s1580, %s1588
          %s1590 = sadd.s32 %s41, %s40
          %s1591 = smul.addr %s1590, 128
          %s1592 = scalar_lea.hbm %s15, %s1591
          %s1594 = sshll.u32 %s1583, 4
          %s1595 = int_to_ptr.vmem [resolvable:$true] %s1594
          %1597 = dma.vmem_to_hbm [thread:$0]  %s1595, 128, %s1592, %s1580
        $region104: #{tpu_custom_call.1} parent=79 // pred_fallthru
          _
      $region80: #{tpu_custom_call.1} parent=5 // pred_fallthru
        _
      %p1598 = scmp.le.s32.totalorder 2, %s31
      // Predicated region
      $region105: #{tpu_custom_call.1} parent=5 // pred_check
        %p1599 = pneg %p1598
      $region106: #{tpu_custom_call.1} parent=5 // pred_check_branch
        %1601 = sbr.rel (%p1599) target = $region108
      $region107: #{tpu_custom_call.1} parent=5 // pred_region
        %s1602 = ssub.s32 %s31, 2
        // Predicated region
        $region109: #{tpu_custom_call.1} parent=107 // pred_check
          %p1603 = pneg %p418
        $region110: #{tpu_custom_call.1} parent=107 // pred_check_branch
          %1605 = sbr.rel (%p1603) target = $region112
        $region111: #{tpu_custom_call.1} parent=107 // pred_region
          %s1606 = sand.u32 %s403, 1
          %s1607 = scalar_lea.sflag [#allocation4], %s1606
          %s1608 = sand.u32 %s403, 1
          %s1609 = smul.addr %s1608, 8
          %s1610 = scalar_lea.vmem [#allocation11], %s1609
          %1611 = dma.done %s1607, 128
        $region112: #{tpu_custom_call.1} parent=107 // pred_fallthru
          _
      $region108: #{tpu_custom_call.1} parent=5 // pred_fallthru
        _
    $region6: #{tpu_custom_call.1} parent=1 // loop_footer
      %s35 = sadd.s32 1, %s31
    $region7: #{tpu_custom_call.1} parent=1 // loop_footer_branch
      %30 = sbr.rel target = $region3
    $region8: #{tpu_custom_call.1} parent=1 // loop_exit
      _
    %1612 = vsyncpa [#allocation3], 1
    %s1613 = scalar_lea.sflag [#allocation3], 1
    %1614 = vsyncpa %s1613, 1
    %1615 = vsyncpa [#allocation6], 1
    %s1616 = scalar_lea.sflag [#allocation6], 1
    %1617 = vsyncpa %s1616, 1
    %1618 = vsyncpa [#allocation9], 1
    %1619 = vsyncpa [#allocation4], 1
    %s1620 = scalar_lea.sflag [#allocation4], 1
    %1621 = vsyncpa %s1620, 1

</llo_original>
